<compile_context>
chip_gen: v5e
topology: v5e:2x2
jax: 0.10.0
libtpu: 0.0.40
codegen_flags: <defaults>
</compile_context>

<pallas_src>
import math
import numpy as np
import jax
import jax.numpy as jnp
from jax.experimental import pallas as pl
from jax.experimental.pallas import tpu as pltpu  # noqa: F401  (not needed at these sizes)

# ---------------- configuration (small, consistent with the module defaults) ----------
NUM_CHANNELS = 4        # num_channels (default 19, small here)
SEQ_LEN = 35            # seq_len
N_CLASSES = 2
STRIDE = 7              # stride_len
N_ENC_LAYERS = 2        # n_enc_layers (default 4, small here)
D_MODEL = 10
NHEAD = 5               # head_dim = 2
DIM_FF = 32             # dim_feedforward (default 128, small here)
DENSE_LEN = 16          # dense_len (default 32, small here)
BATCH = 2
N_WIN = (SEQ_LEN - D_MODEL) // STRIDE + 1   # = 4 unfolded windows per channel
EPS = 1e-5

# derived packing constants
HD = D_MODEL // NHEAD                 # head dim (2)
G = NUM_CHANNELS * NHEAD              # number of (channel, head) groups (20)
GPAD = 128                            # group axis padded to one full vreg of lanes
CD = NUM_CHANNELS * D_MODEL           # packed model width (40)
CFF = NUM_CHANNELS * DIM_FF           # packed FF width (128)
CDL = NUM_CHANNELS * DENSE_LEN        # packed dense width (64)
BT = BATCH * N_WIN                    # packed token rows (8)
SCALE = 1.0 / math.sqrt(HD)
WSLAB = 128                           # constant-slab lane width

# --------------------------- constant-slab row layout ----------------------------------
# Global blocks
R_PE = 0                              # (BT, CD)   positional encoding, tiled over (b, c)
R_NEG = R_PE + BT                     # (BT, BT)   additive cross-batch mask (0 / -1e30)
R_POOL = R_NEG + BT                   # (B,  BT)   1/T mean-over-time pooling matrix
R_AVG = R_POOL + BT                   # (CD, CD)   per-channel block-averaging matrix
R_LAYER0 = R_AVG + CD

# Per-layer blocks (offsets relative to the layer base)
O_WQKV = 0                            # 6 blocks of CD rows  : per-(t, j) QKV weights
O_BQKV = O_WQKV + 6 * CD              # 6 blocks of BT rows  : per-(t, j) QKV biases
O_WO = O_BQKV + 6 * BT                # HD*GPAD rows         : fused out-projection
O_BO = O_WO + HD * GPAD               # BT rows
O_LN1G = O_BO + BT                    # BT rows
O_LN1B = O_LN1G + BT                  # BT rows
O_W1 = O_LN1B + BT                    # CD rows              : block-diag linear1
O_FB1 = O_W1 + CD                     # BT rows
O_W2 = O_FB1 + BT                     # CFF rows             : block-diag linear2
O_FB2 = O_W2 + CFF                    # BT rows
O_LN2G = O_FB2 + BT                   # BT rows
O_LN2B = O_LN2G + BT                  # BT rows
LAYER_ROWS = O_LN2B + BT              # = 768

# Head blocks (offsets relative to R_HEAD)
R_HEAD = R_LAYER0 + N_ENC_LAYERS * LAYER_ROWS
O_WD = 0                              # CD rows   : block-diag per-channel dense
O_BD = O_WD + CD                      # BT rows
O_WH1 = O_BD + BT                     # CDL rows  : fc1
O_BH1 = O_WH1 + CDL                   # BT rows
O_WH2 = O_BH1 + BT                    # 128 rows  : fc2
O_BH2 = O_WH2 + 128                   # BT rows
O_WH3 = O_BH2 + BT                    # 32 rows   : fc3
O_BH3 = O_WH3 + 32                    # BT rows
HEAD_ROWS = O_BH3 + BT
TOTAL_ROWS = R_HEAD + HEAD_ROWS

assert TOTAL_ROWS % 8 == 0 and BT % 8 == 0 and CD % 8 == 0 and CFF % 8 == 0


# ------------------------------- fused whole-model kernel ------------------------------
def fused_kernel(x_ref, cs_ref, out_ref):
    f32 = jnp.float32

    def dotf(a, b):
        return jnp.dot(a, b, preferred_element_type=f32)

    # ---- channel-invariant constants, loaded / shaped once ----
    pe = cs_ref[R_PE:R_PE + BT, 0:CD]                        # (BT, CD)
    pool = cs_ref[R_POOL:R_POOL + BATCH, 0:BT]               # (B, BT)
    avg = cs_ref[R_AVG:R_AVG + CD, 0:CD]                     # (CD, CD)
    # additive cross-batch mask, broadcast to the padded group width ONCE (hoisted).
    # NOTE: safe because every softmax column always contains same-batch (unmasked)
    # rows, so the denominator never collapses to ~0.
    neg = jnp.broadcast_to(cs_ref[R_NEG:R_NEG + BT, 0:BT][:, :, None], (BT, BT, GPAD))

    x = x_ref[...] + pe                                      # (BT, CD) packed hidden state

    def seg_ln(v, g, b):
        # per-channel LayerNorm via the MXU block-averaging matrix (no lane shuffles)
        mu = dotf(v, avg)
        d = v - mu
        var = dotf(d * d, avg)
        return d * jax.lax.rsqrt(var + EPS) * g + b

    for l in range(N_ENC_LAYERS):
        base = R_LAYER0 + l * LAYER_ROWS

        def lw(off, rows, cols=WSLAB, base=base):
            return cs_ref[base + off:base + off + rows, 0:cols]

        # q/k/v per (tensor t, head-dim component j): one aligned MXU dot each.
        # Output lanes g = c*NHEAD + h for g < G, zero beyond (padded to 128).
        # SCALE is folded into the query (t == 0) weights/bias host-side.
        comp = [[dotf(x, lw(O_WQKV + (t * HD + j) * CD, CD)) +
                 lw(O_BQKV + (t * HD + j) * BT, BT)
                 for j in range(HD)] for t in range(3)]

        # attention scores for every (key row m, query row n, group g) at once
        s = comp[1][0][:, None, :] * comp[0][0][None, :, :]
        for j in range(1, HD):
            s = s + comp[1][j][:, None, :] * comp[0][j][None, :, :]
        s = s + neg                                          # mask cross-batch pairs
        s = s - jnp.max(s, axis=0, keepdims=True)            # one softmax for all groups
        p = jnp.exp(s)
        p = p * pl.reciprocal(jnp.sum(p, axis=0, keepdims=True), approx=True)

        # context components stacked at 128-aligned lane offsets -> one fused out-proj
        ctx = jnp.concatenate(
            [jnp.sum(p * comp[2][j][:, None, :], axis=0) for j in range(HD)], axis=-1)
        attn = dotf(ctx, lw(O_WO, HD * GPAD, CD)) + lw(O_BO, BT, CD)

        # post-norm encoder layer (PyTorch default norm_first=False); dropout = identity
        x = seg_ln(x + attn, lw(O_LN1G, BT, CD), lw(O_LN1B, BT, CD))
        ff = jnp.maximum(dotf(x, lw(O_W1, CD, CFF)) + lw(O_FB1, BT, CFF), 0.0)
        ff = dotf(ff, lw(O_W2, CFF, CD)) + lw(O_FB2, BT, CD)
        x = seg_ln(x + ff, lw(O_LN2G, BT, CD), lw(O_LN2B, BT, CD))

    def hw(off, rows, cols=WSLAB):
        return cs_ref[R_HEAD + off:R_HEAD + off + rows, 0:cols]

    # mean over time, per-channel dense, then the fused 3-layer FC head
    pooled = dotf(pool, x)                                                   # (B, CD)
    feat = dotf(pooled, hw(O_WD, CD, CDL)) + hw(O_BD, BATCH, CDL)            # (B, CDL)
    h = jnp.maximum(dotf(feat, hw(O_WH1, CDL, 128)) + hw(O_BH1, BATCH, 128), 0.0)
    h = jnp.maximum(dotf(h, hw(O_WH2, 128, 32)) + hw(O_BH2, BATCH, 32), 0.0)
    out_ref[...] = dotf(h, hw(O_WH3, 32, N_CLASSES)) + hw(O_BH3, BATCH, N_CLASSES)


def transformer_forward(x, const_slab):
    # unfold(1, d_model, stride) per channel and lane-pack: (B, C, S) -> (B*T, C*D)
    idx = jnp.arange(N_WIN)[:, None] * STRIDE + jnp.arange(D_MODEL)[None, :]
    win = x[:, :, idx]                                                  # (B, C, T, D)
    x_packed = jnp.transpose(win, (0, 2, 1, 3)).reshape(BT, CD)

    return pl.pallas_call(
        fused_kernel,
        out_shape=jax.ShapeDtypeStruct((BATCH, N_CLASSES), jnp.float32),
    )(x_packed, const_slab)


# ----------------------------------- host-side packing ---------------------------------
def build_pe(T, d_model):
    position = jnp.arange(T, dtype=jnp.float32)[:, None]
    div_term = jnp.exp(jnp.arange(0, d_model, 2, dtype=jnp.float32)
                       * (-np.log(10000.0) / d_model))
    pe = jnp.zeros((T, d_model), jnp.float32)
    pe = pe.at[:, 0::2].set(jnp.sin(position * div_term))
    pe = pe.at[:, 1::2].set(jnp.cos(position * div_term))   # d_model is even
    return pe


def init_params(key):
    C, L, D, FF, DL = NUM_CHANNELS, N_ENC_LAYERS, D_MODEL, DIM_FF, DENSE_LEN
    ks = iter(jax.random.split(key, 32))

    def w(shape, scale=0.1):
        return (scale * jax.random.normal(next(ks), shape)).astype(jnp.float32)

    return dict(
        wqkv=w((C, L, D, 3 * D)), bqkv=w((C, L, 1, 3 * D), 0.05),
        wo_t=w((C, L, D, D)), bo=w((C, L, 1, D), 0.05),
        ln1_g=1.0 + w((C, L, 1, D), 0.05), ln1_b=w((C, L, 1, D), 0.05),
        w1_t=w((C, L, D, FF)), b1=w((C, L, 1, FF), 0.05),
        w2_t=w((C, L, FF, D)), b2=w((C, L, 1, D), 0.05),
        ln2_g=1.0 + w((C, L, 1, D), 0.05), ln2_b=w((C, L, 1, D), 0.05),
        wd_t=w((C, D, DL)), bd=w((C, 1, DL), 0.05),
        wf1=w((C * DL, 128)), bf1=w((1, 128), 0.05),
        wf2=w((128, 32)), bf2=w((1, 32), 0.05),
        wf3=w((32, N_CLASSES)), bf3=w((1, N_CLASSES), 0.05),
    )


def pack_params(P):
    """One-time host-side packing of every constant into a single (TOTAL_ROWS, 128) slab."""
    C, L, D, NH, FF, DL = NUM_CHANNELS, N_ENC_LAYERS, D_MODEL, NHEAD, DIM_FF, DENSE_LEN
    Pn = {k: np.asarray(v, np.float32) for k, v in P.items()}
    S = np.zeros((TOTAL_ROWS, WSLAB), np.float32)

    # positional encoding tiled over (batch, channel)
    pe = np.asarray(build_pe(N_WIN, D), np.float32)                      # (T, D)
    S[R_PE:R_PE + BT, :CD] = np.tile(pe, (BATCH, C))

    # additive cross-batch mask and 1/T pooling matrix
    rows = np.arange(BT)
    same = (rows[:, None] // N_WIN) == (rows[None, :] // N_WIN)
    S[R_NEG:R_NEG + BT, :BT] = np.where(same, 0.0, -1e30)
    S[R_POOL:R_POOL + BATCH, :BT] = (
        ((rows[None, :] // N_WIN) == np.arange(BATCH)[:, None]).astype(np.float32) / N_WIN)

    # per-channel block-averaging matrix for the MXU LayerNorm
    for c in range(C):
        S[R_AVG + c * D:R_AVG + (c + 1) * D, c * D:(c + 1) * D] = 1.0 / D

    for l in range(L):
        b = R_LAYER0 + l * LAYER_ROWS
        # QKV: one (CD, 128) block per (tensor t, component j); lanes g = c*NH + h.
        # Block-diagonal over channels; SCALE folded into the query blocks.
        for t in range(3):
            for j in range(HD):
                q = t * HD + j
                scale = SCALE if t == 0 else 1.0
                r0 = b + O_WQKV + q * CD
                rb = b + O_BQKV + q * BT
                for c in range(C):
                    for h in range(NH):
                        g = c * NH + h
                        col = t * D + h * HD + j
                        S[r0 + c * D:r0 + (c + 1) * D, g] = Pn['wqkv'][c, l, :, col] * scale
                        S[rb:rb + BT, g] = Pn['bqkv'][c, l, 0, col] * scale
        # fused out-projection: row (j*GPAD + g) -> channel-c output columns
        for j in range(HD):
            for c in range(C):
                for h in range(NH):
                    g = c * NH + h
                    S[b + O_WO + j * GPAD + g, c * D:(c + 1) * D] = Pn['wo_t'][c, l, h * HD + j, :]

        def catc(name, c=C, l=l):
            return np.concatenate([Pn[name][cc, l, 0] for cc in range(c)])

        S[b + O_BO:b + O_BO + BT, :CD] = catc('bo')[None, :]
        S[b + O_LN1G:b + O_LN1G + BT, :CD] = catc('ln1_g')[None, :]
        S[b + O_LN1B:b + O_LN1B + BT, :CD] = catc('ln1_b')[None, :]
        for c in range(C):
            S[b + O_W1 + c * D:b + O_W1 + (c + 1) * D, c * FF:(c + 1) * FF] = Pn['w1_t'][c, l]
            S[b + O_W2 + c * FF:b + O_W2 + (c + 1) * FF, c * D:(c + 1) * D] = Pn['w2_t'][c, l]
        S[b + O_FB1:b + O_FB1 + BT, :CFF] = catc('b1')[None, :]
        S[b + O_FB2:b + O_FB2 + BT, :CD] = catc('b2')[None, :]
        S[b + O_LN2G:b + O_LN2G + BT, :CD] = catc('ln2_g')[None, :]
        S[b + O_LN2B:b + O_LN2B + BT, :CD] = catc('ln2_b')[None, :]

    hb = R_HEAD
    for c in range(C):
        S[hb + O_WD + c * D:hb + O_WD + (c + 1) * D, c * DL:(c + 1) * DL] = Pn['wd_t'][c]
    S[hb + O_BD:hb + O_BD + BT, :CDL] = np.concatenate(
        [Pn['bd'][c, 0] for c in range(C)])[None, :]
    S[hb + O_WH1:hb + O_WH1 + CDL, :128] = Pn['wf1']
    S[hb + O_BH1:hb + O_BH1 + BT, :128] = Pn['bf1']
    S[hb + O_WH2:hb + O_WH2 + 128, :32] = Pn['wf2']
    S[hb + O_BH2:hb + O_BH2 + BT, :32] = Pn['bf2']
    S[hb + O_WH3:hb + O_WH3 + 32, :N_CLASSES] = Pn['wf3']
    S[hb + O_BH3:hb + O_BH3 + BT, :N_CLASSES] = Pn['bf3']

    return jnp.asarray(S)


# ------------------------------- pure-JAX reference ------------------------------------
def reference_forward(x, P, pe):
    B, C, _ = x.shape
    D, T, L, nh = D_MODEL, N_WIN, N_ENC_LAYERS, NHEAD
    hd = D // nh
    idx = np.arange(T)[:, None] * STRIDE + np.arange(D)[None, :]

    def ln(v, g, b):
        mu = jnp.mean(v, -1, keepdims=True)
        var = jnp.mean((v - mu) ** 2, -1, keepdims=True)
        return (v - mu) * jax.lax.rsqrt(var + EPS) * g + b

    feats = []
    for ch in range(C):
        h = x[:, ch, :][:, idx] + pe[None]                       # (B, T, D)
        for l in range(L):
            qkv = h @ P['wqkv'][ch, l] + P['bqkv'][ch, l, 0]
            q, k, v = jnp.split(qkv, 3, axis=-1)
            q = q.reshape(B, T, nh, hd).transpose(0, 2, 1, 3)
            k = k.reshape(B, T, nh, hd).transpose(0, 2, 1, 3)
            v = v.reshape(B, T, nh, hd).transpose(0, 2, 1, 3)
            s = jnp.einsum('bhtd,bhsd->bhts', q, k) / np.sqrt(hd)
            p = jax.nn.softmax(s, axis=-1)
            ctx = jnp.einsum('bhts,bhsd->bhtd', p, v).transpose(0, 2, 1, 3).reshape(B, T, D)
            attn = ctx @ P['wo_t'][ch, l] + P['bo'][ch, l, 0]
            h = ln(h + attn, P['ln1_g'][ch, l, 0], P['ln1_b'][ch, l, 0])
            ff = (jax.nn.relu(h @ P['w1_t'][ch, l] + P['b1'][ch, l, 0])
                  @ P['w2_t'][ch, l] + P['b2'][ch, l, 0])
            h = ln(h + ff, P['ln2_g'][ch, l, 0], P['ln2_b'][ch, l, 0])
        pooled = h.mean(axis=1)
        feats.append(pooled @ P['wd_t'][ch] + P['bd'][ch, 0])
    f = jnp.concatenate(feats, axis=1)
    f = jax.nn.relu(f @ P['wf1'] + P['bf1'][0])
    f = jax.nn.relu(f @ P['wf2'] + P['bf2'][0])
    return f @ P['wf3'] + P['bf3'][0]


# ---------------------------------------- main ------------------------------------------
if __name__ == "__main__":
    key = jax.random.PRNGKey(0)
    kx, kp = jax.random.split(key)

    x = jax.random.normal(kx, (BATCH, NUM_CHANNELS, SEQ_LEN), jnp.float32)
    params = init_params(kp)
    const_slab = pack_params(params)

    fwd = jax.jit(transformer_forward)
    out = jax.block_until_ready(fwd(x, const_slab))                     # (B, n_classes)

    ref = reference_forward(x, params, build_pe(N_WIN, D_MODEL))
    # Tolerance covers (a) a different but exact-f32 op mix vs. the XLA reference
    # (whose matmul precision is platform-default), (b) the approx (EUP) reciprocal
    # in the softmax denominator (~1e-4 relative).  Real logic bugs produce errors
    # orders of magnitude larger.
    np.testing.assert_allclose(np.asarray(out), np.asarray(ref), rtol=5e-3, atol=5e-3)

    print("KERNEL_OK")
</pallas_src>

<mosaic_0001>
module attributes {stable_mosaic.version = 11 : i64} {
  func.func @fused_kernel(%arg0: memref<8x40xf32, #tpu.memory_space<vmem>>, %arg1: memref<1896x128xf32, #tpu.memory_space<vmem>>, %arg2: memref<2x2xf32, #tpu.memory_space<vmem>>) attributes {dimension_semantics = [], scalar_prefetch = 0 : i64, scratch_operands = 0 : i64, tpu.core_type = #tpu.core_type<tc>} {
    %c0 = arith.constant 0 : index
    %c0_0 = arith.constant 0 : index
    %0 = vector.load %arg1[%c0, %c0_0] : memref<1896x128xf32, #tpu.memory_space<vmem>>, vector<8x40xf32>
    %c16 = arith.constant 16 : index
    %c0_1 = arith.constant 0 : index
    %1 = vector.load %arg1[%c16, %c0_1] : memref<1896x128xf32, #tpu.memory_space<vmem>>, vector<2x8xf32>
    %c24 = arith.constant 24 : index
    %c0_2 = arith.constant 0 : index
    %2 = vector.load %arg1[%c24, %c0_2] : memref<1896x128xf32, #tpu.memory_space<vmem>>, vector<40x40xf32>
    %c8 = arith.constant 8 : index
    %c0_3 = arith.constant 0 : index
    %3 = vector.load %arg1[%c8, %c0_3] : memref<1896x128xf32, #tpu.memory_space<vmem>>, vector<8x8xf32>
    %4 = vector.shape_cast %3 : vector<8x8xf32> to vector<8x8x1xf32>
    %5 = vector.shape_cast %4 : vector<8x8x1xf32> to vector<8x8x1xf32>
    %6 = vector.broadcast %5 : vector<8x8x1xf32> to vector<8x8x128xf32>
    %c0_4 = arith.constant 0 : index
    %c0_5 = arith.constant 0 : index
    %7 = vector.load %arg0[%c0_4, %c0_5] : memref<8x40xf32, #tpu.memory_space<vmem>>, vector<8x40xf32>
    %8 = arith.addf %7, %0 : vector<8x40xf32>
    %c64 = arith.constant 64 : index
    %c0_6 = arith.constant 0 : index
    %9 = vector.load %arg1[%c64, %c0_6] : memref<1896x128xf32, #tpu.memory_space<vmem>>, vector<40x128xf32>
    %cst = arith.constant dense<0.000000e+00> : vector<8x128xf32>
    %10 = tpu.matmul %8, %9, %cst {dimension_numbers = #tpu.dot_dimension_numbers<[1], [0], [0], [1], [0, 0, 1, 1], [], []>} : vector<8x40xf32>, vector<40x128xf32>, vector<8x128xf32> -> vector<8x128xf32>
    %c304 = arith.constant 304 : index
    %c0_7 = arith.constant 0 : index
    %11 = vector.load %arg1[%c304, %c0_7] : memref<1896x128xf32, #tpu.memory_space<vmem>>, vector<8x128xf32>
    %12 = arith.addf %10, %11 : vector<8x128xf32>
    %c104 = arith.constant 104 : index
    %c0_8 = arith.constant 0 : index
    %13 = vector.load %arg1[%c104, %c0_8] : memref<1896x128xf32, #tpu.memory_space<vmem>>, vector<40x128xf32>
    %cst_9 = arith.constant dense<0.000000e+00> : vector<8x128xf32>
    %14 = tpu.matmul %8, %13, %cst_9 {dimension_numbers = #tpu.dot_dimension_numbers<[1], [0], [0], [1], [0, 0, 1, 1], [], []>} : vector<8x40xf32>, vector<40x128xf32>, vector<8x128xf32> -> vector<8x128xf32>
    %c312 = arith.constant 312 : index
    %c0_10 = arith.constant 0 : index
    %15 = vector.load %arg1[%c312, %c0_10] : memref<1896x128xf32, #tpu.memory_space<vmem>>, vector<8x128xf32>
    %16 = arith.addf %14, %15 : vector<8x128xf32>
    %c144 = arith.constant 144 : index
    %c0_11 = arith.constant 0 : index
    %17 = vector.load %arg1[%c144, %c0_11] : memref<1896x128xf32, #tpu.memory_space<vmem>>, vector<40x128xf32>
    %cst_12 = arith.constant dense<0.000000e+00> : vector<8x128xf32>
    %18 = tpu.matmul %8, %17, %cst_12 {dimension_numbers = #tpu.dot_dimension_numbers<[1], [0], [0], [1], [0, 0, 1, 1], [], []>} : vector<8x40xf32>, vector<40x128xf32>, vector<8x128xf32> -> vector<8x128xf32>
    %c320 = arith.constant 320 : index
    %c0_13 = arith.constant 0 : index
    %19 = vector.load %arg1[%c320, %c0_13] : memref<1896x128xf32, #tpu.memory_space<vmem>>, vector<8x128xf32>
    %20 = arith.addf %18, %19 : vector<8x128xf32>
    %c184 = arith.constant 184 : index
    %c0_14 = arith.constant 0 : index
    %21 = vector.load %arg1[%c184, %c0_14] : memref<1896x128xf32, #tpu.memory_space<vmem>>, vector<40x128xf32>
    %cst_15 = arith.constant dense<0.000000e+00> : vector<8x128xf32>
    %22 = tpu.matmul %8, %21, %cst_15 {dimension_numbers = #tpu.dot_dimension_numbers<[1], [0], [0], [1], [0, 0, 1, 1], [], []>} : vector<8x40xf32>, vector<40x128xf32>, vector<8x128xf32> -> vector<8x128xf32>
    %c328 = arith.constant 328 : index
    %c0_16 = arith.constant 0 : index
    %23 = vector.load %arg1[%c328, %c0_16] : memref<1896x128xf32, #tpu.memory_space<vmem>>, vector<8x128xf32>
    %24 = arith.addf %22, %23 : vector<8x128xf32>
    %c224 = arith.constant 224 : index
    %c0_17 = arith.constant 0 : index
    %25 = vector.load %arg1[%c224, %c0_17] : memref<1896x128xf32, #tpu.memory_space<vmem>>, vector<40x128xf32>
    %cst_18 = arith.constant dense<0.000000e+00> : vector<8x128xf32>
    %26 = tpu.matmul %8, %25, %cst_18 {dimension_numbers = #tpu.dot_dimension_numbers<[1], [0], [0], [1], [0, 0, 1, 1], [], []>} : vector<8x40xf32>, vector<40x128xf32>, vector<8x128xf32> -> vector<8x128xf32>
    %c336 = arith.constant 336 : index
    %c0_19 = arith.constant 0 : index
    %27 = vector.load %arg1[%c336, %c0_19] : memref<1896x128xf32, #tpu.memory_space<vmem>>, vector<8x128xf32>
    %28 = arith.addf %26, %27 : vector<8x128xf32>
    %c264 = arith.constant 264 : index
    %c0_20 = arith.constant 0 : index
    %29 = vector.load %arg1[%c264, %c0_20] : memref<1896x128xf32, #tpu.memory_space<vmem>>, vector<40x128xf32>
    %cst_21 = arith.constant dense<0.000000e+00> : vector<8x128xf32>
    %30 = tpu.matmul %8, %29, %cst_21 {dimension_numbers = #tpu.dot_dimension_numbers<[1], [0], [0], [1], [0, 0, 1, 1], [], []>} : vector<8x40xf32>, vector<40x128xf32>, vector<8x128xf32> -> vector<8x128xf32>
    %c344 = arith.constant 344 : index
    %c0_22 = arith.constant 0 : index
    %31 = vector.load %arg1[%c344, %c0_22] : memref<1896x128xf32, #tpu.memory_space<vmem>>, vector<8x128xf32>
    %32 = arith.addf %30, %31 : vector<8x128xf32>
    %33 = vector.shape_cast %20 : vector<8x128xf32> to vector<8x1x128xf32>
    %34 = vector.shape_cast %12 : vector<8x128xf32> to vector<1x8x128xf32>
    %35 = vector.broadcast %33 : vector<8x1x128xf32> to vector<8x8x128xf32>
    %36 = vector.broadcast %34 : vector<1x8x128xf32> to vector<8x8x128xf32>
    %37 = arith.mulf %35, %36 : vector<8x8x128xf32>
    %38 = vector.shape_cast %24 : vector<8x128xf32> to vector<8x1x128xf32>
    %39 = vector.shape_cast %16 : vector<8x128xf32> to vector<1x8x128xf32>
    %40 = vector.broadcast %38 : vector<8x1x128xf32> to vector<8x8x128xf32>
    %41 = vector.broadcast %39 : vector<1x8x128xf32> to vector<8x8x128xf32>
    %42 = arith.mulf %40, %41 : vector<8x8x128xf32>
    %43 = arith.addf %37, %42 : vector<8x8x128xf32>
    %44 = arith.addf %43, %6 : vector<8x8x128xf32>
    %cst_23 = arith.constant dense<0xFF800000> : vector<8x128xf32>
    %45 = vector.multi_reduction <maximumf>, %44, %cst_23 [0] : vector<8x8x128xf32> to vector<8x128xf32>
    %46 = vector.shape_cast %45 : vector<8x128xf32> to vector<1x8x128xf32>
    %47 = vector.broadcast %46 : vector<1x8x128xf32> to vector<8x8x128xf32>
    %48 = arith.subf %44, %47 : vector<8x8x128xf32>
    %49 = math.exp %48 : vector<8x8x128xf32>
    %cst_24 = arith.constant dense<0.000000e+00> : vector<8x128xf32>
    %50 = vector.multi_reduction <add>, %49, %cst_24 [0] : vector<8x8x128xf32> to vector<8x128xf32>
    %51 = vector.shape_cast %50 : vector<8x128xf32> to vector<1x8x128xf32>
    %52 = tpu.reciprocal %51 {approx = true} : vector<1x8x128xf32> -> vector<1x8x128xf32>
    %53 = vector.broadcast %52 : vector<1x8x128xf32> to vector<8x8x128xf32>
    %54 = arith.mulf %49, %53 : vector<8x8x128xf32>
    %55 = vector.shape_cast %28 : vector<8x128xf32> to vector<8x1x128xf32>
    %56 = vector.broadcast %55 : vector<8x1x128xf32> to vector<8x8x128xf32>
    %57 = arith.mulf %54, %56 : vector<8x8x128xf32>
    %cst_25 = arith.constant dense<0.000000e+00> : vector<8x128xf32>
    %58 = vector.multi_reduction <add>, %57, %cst_25 [0] : vector<8x8x128xf32> to vector<8x128xf32>
    %59 = vector.shape_cast %32 : vector<8x128xf32> to vector<8x1x128xf32>
    %60 = vector.broadcast %59 : vector<8x1x128xf32> to vector<8x8x128xf32>
    %61 = arith.mulf %54, %60 : vector<8x8x128xf32>
    %cst_26 = arith.constant dense<0.000000e+00> : vector<8x128xf32>
    %62 = vector.multi_reduction <add>, %61, %cst_26 [0] : vector<8x8x128xf32> to vector<8x128xf32>
    %63 = tpu.concatenate %58, %62 in 1 : vector<8x128xf32>, vector<8x128xf32> -> vector<8x256xf32>
    %c352 = arith.constant 352 : index
    %c0_27 = arith.constant 0 : index
    %64 = vector.load %arg1[%c352, %c0_27] : memref<1896x128xf32, #tpu.memory_space<vmem>>, vector<256x40xf32>
    %cst_28 = arith.constant dense<0.000000e+00> : vector<8x40xf32>
    %65 = tpu.matmul %63, %64, %cst_28 {dimension_numbers = #tpu.dot_dimension_numbers<[1], [0], [0], [1], [0, 0, 1, 1], [], []>} : vector<8x256xf32>, vector<256x40xf32>, vector<8x40xf32> -> vector<8x40xf32>
    %c608 = arith.constant 608 : index
    %c0_29 = arith.constant 0 : index
    %66 = vector.load %arg1[%c608, %c0_29] : memref<1896x128xf32, #tpu.memory_space<vmem>>, vector<8x40xf32>
    %67 = arith.addf %65, %66 : vector<8x40xf32>
    %68 = arith.addf %8, %67 : vector<8x40xf32>
    %c616 = arith.constant 616 : index
    %c0_30 = arith.constant 0 : index
    %69 = vector.load %arg1[%c616, %c0_30] : memref<1896x128xf32, #tpu.memory_space<vmem>>, vector<8x40xf32>
    %c624 = arith.constant 624 : index
    %c0_31 = arith.constant 0 : index
    %70 = vector.load %arg1[%c624, %c0_31] : memref<1896x128xf32, #tpu.memory_space<vmem>>, vector<8x40xf32>
    %cst_32 = arith.constant dense<0.000000e+00> : vector<8x40xf32>
    %71 = tpu.matmul %68, %2, %cst_32 {dimension_numbers = #tpu.dot_dimension_numbers<[1], [0], [0], [1], [0, 0, 1, 1], [], []>} : vector<8x40xf32>, vector<40x40xf32>, vector<8x40xf32> -> vector<8x40xf32>
    %72 = arith.subf %68, %71 : vector<8x40xf32>
    %73 = arith.mulf %72, %72 : vector<8x40xf32>
    %cst_33 = arith.constant dense<0.000000e+00> : vector<8x40xf32>
    %74 = tpu.matmul %73, %2, %cst_33 {dimension_numbers = #tpu.dot_dimension_numbers<[1], [0], [0], [1], [0, 0, 1, 1], [], []>} : vector<8x40xf32>, vector<40x40xf32>, vector<8x40xf32> -> vector<8x40xf32>
    %cst_34 = arith.constant 9.99999974E-6 : f32
    %75 = vector.broadcast %cst_34 : f32 to vector<8x40xf32>
    %76 = arith.addf %74, %75 : vector<8x40xf32>
    %77 = math.rsqrt %76 : vector<8x40xf32>
    %78 = arith.mulf %72, %77 : vector<8x40xf32>
    %79 = arith.mulf %78, %69 : vector<8x40xf32>
    %80 = arith.addf %79, %70 : vector<8x40xf32>
    %c632 = arith.constant 632 : index
    %c0_35 = arith.constant 0 : index
    %81 = vector.load %arg1[%c632, %c0_35] : memref<1896x128xf32, #tpu.memory_space<vmem>>, vector<40x128xf32>
    %cst_36 = arith.constant dense<0.000000e+00> : vector<8x128xf32>
    %82 = tpu.matmul %80, %81, %cst_36 {dimension_numbers = #tpu.dot_dimension_numbers<[1], [0], [0], [1], [0, 0, 1, 1], [], []>} : vector<8x40xf32>, vector<40x128xf32>, vector<8x128xf32> -> vector<8x128xf32>
    %c672 = arith.constant 672 : index
    %c0_37 = arith.constant 0 : index
    %83 = vector.load %arg1[%c672, %c0_37] : memref<1896x128xf32, #tpu.memory_space<vmem>>, vector<8x128xf32>
    %84 = arith.addf %82, %83 : vector<8x128xf32>
    %cst_38 = arith.constant 0.000000e+00 : f32
    %85 = vector.broadcast %cst_38 : f32 to vector<8x128xf32>
    %86 = arith.maximumf %84, %85 : vector<8x128xf32>
    %c680 = arith.constant 680 : index
    %c0_39 = arith.constant 0 : index
    %87 = vector.load %arg1[%c680, %c0_39] : memref<1896x128xf32, #tpu.memory_space<vmem>>, vector<128x40xf32>
    %cst_40 = arith.constant dense<0.000000e+00> : vector<8x40xf32>
    %88 = tpu.matmul %86, %87, %cst_40 {dimension_numbers = #tpu.dot_dimension_numbers<[1], [0], [0], [1], [0, 0, 1, 1], [], []>} : vector<8x128xf32>, vector<128x40xf32>, vector<8x40xf32> -> vector<8x40xf32>
    %c808 = arith.constant 808 : index
    %c0_41 = arith.constant 0 : index
    %89 = vector.load %arg1[%c808, %c0_41] : memref<1896x128xf32, #tpu.memory_space<vmem>>, vector<8x40xf32>
    %90 = arith.addf %88, %89 : vector<8x40xf32>
    %91 = arith.addf %80, %90 : vector<8x40xf32>
    %c816 = arith.constant 816 : index
    %c0_42 = arith.constant 0 : index
    %92 = vector.load %arg1[%c816, %c0_42] : memref<1896x128xf32, #tpu.memory_space<vmem>>, vector<8x40xf32>
    %c824 = arith.constant 824 : index
    %c0_43 = arith.constant 0 : index
    %93 = vector.load %arg1[%c824, %c0_43] : memref<1896x128xf32, #tpu.memory_space<vmem>>, vector<8x40xf32>
    %cst_44 = arith.constant dense<0.000000e+00> : vector<8x40xf32>
    %94 = tpu.matmul %91, %2, %cst_44 {dimension_numbers = #tpu.dot_dimension_numbers<[1], [0], [0], [1], [0, 0, 1, 1], [], []>} : vector<8x40xf32>, vector<40x40xf32>, vector<8x40xf32> -> vector<8x40xf32>
    %95 = arith.subf %91, %94 : vector<8x40xf32>
    %96 = arith.mulf %95, %95 : vector<8x40xf32>
    %cst_45 = arith.constant dense<0.000000e+00> : vector<8x40xf32>
    %97 = tpu.matmul %96, %2, %cst_45 {dimension_numbers = #tpu.dot_dimension_numbers<[1], [0], [0], [1], [0, 0, 1, 1], [], []>} : vector<8x40xf32>, vector<40x40xf32>, vector<8x40xf32> -> vector<8x40xf32>
    %cst_46 = arith.constant 9.99999974E-6 : f32
    %98 = vector.broadcast %cst_46 : f32 to vector<8x40xf32>
    %99 = arith.addf %97, %98 : vector<8x40xf32>
    %100 = math.rsqrt %99 : vector<8x40xf32>
    %101 = arith.mulf %95, %100 : vector<8x40xf32>
    %102 = arith.mulf %101, %92 : vector<8x40xf32>
    %103 = arith.addf %102, %93 : vector<8x40xf32>
    %c832 = arith.constant 832 : index
    %c0_47 = arith.constant 0 : index
    %104 = vector.load %arg1[%c832, %c0_47] : memref<1896x128xf32, #tpu.memory_space<vmem>>, vector<40x128xf32>
    %cst_48 = arith.constant dense<0.000000e+00> : vector<8x128xf32>
    %105 = tpu.matmul %103, %104, %cst_48 {dimension_numbers = #tpu.dot_dimension_numbers<[1], [0], [0], [1], [0, 0, 1, 1], [], []>} : vector<8x40xf32>, vector<40x128xf32>, vector<8x128xf32> -> vector<8x128xf32>
    %c1072 = arith.constant 1072 : index
    %c0_49 = arith.constant 0 : index
    %106 = vector.load %arg1[%c1072, %c0_49] : memref<1896x128xf32, #tpu.memory_space<vmem>>, vector<8x128xf32>
    %107 = arith.addf %105, %106 : vector<8x128xf32>
    %c872 = arith.constant 872 : index
    %c0_50 = arith.constant 0 : index
    %108 = vector.load %arg1[%c872, %c0_50] : memref<1896x128xf32, #tpu.memory_space<vmem>>, vector<40x128xf32>
    %cst_51 = arith.constant dense<0.000000e+00> : vector<8x128xf32>
    %109 = tpu.matmul %103, %108, %cst_51 {dimension_numbers = #tpu.dot_dimension_numbers<[1], [0], [0], [1], [0, 0, 1, 1], [], []>} : vector<8x40xf32>, vector<40x128xf32>, vector<8x128xf32> -> vector<8x128xf32>
    %c1080 = arith.constant 1080 : index
    %c0_52 = arith.constant 0 : index
    %110 = vector.load %arg1[%c1080, %c0_52] : memref<1896x128xf32, #tpu.memory_space<vmem>>, vector<8x128xf32>
    %111 = arith.addf %109, %110 : vector<8x128xf32>
    %c912 = arith.constant 912 : index
    %c0_53 = arith.constant 0 : index
    %112 = vector.load %arg1[%c912, %c0_53] : memref<1896x128xf32, #tpu.memory_space<vmem>>, vector<40x128xf32>
    %cst_54 = arith.constant dense<0.000000e+00> : vector<8x128xf32>
    %113 = tpu.matmul %103, %112, %cst_54 {dimension_numbers = #tpu.dot_dimension_numbers<[1], [0], [0], [1], [0, 0, 1, 1], [], []>} : vector<8x40xf32>, vector<40x128xf32>, vector<8x128xf32> -> vector<8x128xf32>
    %c1088 = arith.constant 1088 : index
    %c0_55 = arith.constant 0 : index
    %114 = vector.load %arg1[%c1088, %c0_55] : memref<1896x128xf32, #tpu.memory_space<vmem>>, vector<8x128xf32>
    %115 = arith.addf %113, %114 : vector<8x128xf32>
    %c952 = arith.constant 952 : index
    %c0_56 = arith.constant 0 : index
    %116 = vector.load %arg1[%c952, %c0_56] : memref<1896x128xf32, #tpu.memory_space<vmem>>, vector<40x128xf32>
    %cst_57 = arith.constant dense<0.000000e+00> : vector<8x128xf32>
    %117 = tpu.matmul %103, %116, %cst_57 {dimension_numbers = #tpu.dot_dimension_numbers<[1], [0], [0], [1], [0, 0, 1, 1], [], []>} : vector<8x40xf32>, vector<40x128xf32>, vector<8x128xf32> -> vector<8x128xf32>
    %c1096 = arith.constant 1096 : index
    %c0_58 = arith.constant 0 : index
    %118 = vector.load %arg1[%c1096, %c0_58] : memref<1896x128xf32, #tpu.memory_space<vmem>>, vector<8x128xf32>
    %119 = arith.addf %117, %118 : vector<8x128xf32>
    %c992 = arith.constant 992 : index
    %c0_59 = arith.constant 0 : index
    %120 = vector.load %arg1[%c992, %c0_59] : memref<1896x128xf32, #tpu.memory_space<vmem>>, vector<40x128xf32>
    %cst_60 = arith.constant dense<0.000000e+00> : vector<8x128xf32>
    %121 = tpu.matmul %103, %120, %cst_60 {dimension_numbers = #tpu.dot_dimension_numbers<[1], [0], [0], [1], [0, 0, 1, 1], [], []>} : vector<8x40xf32>, vector<40x128xf32>, vector<8x128xf32> -> vector<8x128xf32>
    %c1104 = arith.constant 1104 : index
    %c0_61 = arith.constant 0 : index
    %122 = vector.load %arg1[%c1104, %c0_61] : memref<1896x128xf32, #tpu.memory_space<vmem>>, vector<8x128xf32>
    %123 = arith.addf %121, %122 : vector<8x128xf32>
    %c1032 = arith.constant 1032 : index
    %c0_62 = arith.constant 0 : index
    %124 = vector.load %arg1[%c1032, %c0_62] : memref<1896x128xf32, #tpu.memory_space<vmem>>, vector<40x128xf32>
    %cst_63 = arith.constant dense<0.000000e+00> : vector<8x128xf32>
    %125 = tpu.matmul %103, %124, %cst_63 {dimension_numbers = #tpu.dot_dimension_numbers<[1], [0], [0], [1], [0, 0, 1, 1], [], []>} : vector<8x40xf32>, vector<40x128xf32>, vector<8x128xf32> -> vector<8x128xf32>
    %c1112 = arith.constant 1112 : index
    %c0_64 = arith.constant 0 : index
    %126 = vector.load %arg1[%c1112, %c0_64] : memref<1896x128xf32, #tpu.memory_space<vmem>>, vector<8x128xf32>
    %127 = arith.addf %125, %126 : vector<8x128xf32>
    %128 = vector.shape_cast %115 : vector<8x128xf32> to vector<8x1x128xf32>
    %129 = vector.shape_cast %107 : vector<8x128xf32> to vector<1x8x128xf32>
    %130 = vector.broadcast %128 : vector<8x1x128xf32> to vector<8x8x128xf32>
    %131 = vector.broadcast %129 : vector<1x8x128xf32> to vector<8x8x128xf32>
    %132 = arith.mulf %130, %131 : vector<8x8x128xf32>
    %133 = vector.shape_cast %119 : vector<8x128xf32> to vector<8x1x128xf32>
    %134 = vector.shape_cast %111 : vector<8x128xf32> to vector<1x8x128xf32>
    %135 = vector.broadcast %133 : vector<8x1x128xf32> to vector<8x8x128xf32>
    %136 = vector.broadcast %134 : vector<1x8x128xf32> to vector<8x8x128xf32>
    %137 = arith.mulf %135, %136 : vector<8x8x128xf32>
    %138 = arith.addf %132, %137 : vector<8x8x128xf32>
    %139 = arith.addf %138, %6 : vector<8x8x128xf32>
    %cst_65 = arith.constant dense<0xFF800000> : vector<8x128xf32>
    %140 = vector.multi_reduction <maximumf>, %139, %cst_65 [0] : vector<8x8x128xf32> to vector<8x128xf32>
    %141 = vector.shape_cast %140 : vector<8x128xf32> to vector<1x8x128xf32>
    %142 = vector.broadcast %141 : vector<1x8x128xf32> to vector<8x8x128xf32>
    %143 = arith.subf %139, %142 : vector<8x8x128xf32>
    %144 = math.exp %143 : vector<8x8x128xf32>
    %cst_66 = arith.constant dense<0.000000e+00> : vector<8x128xf32>
    %145 = vector.multi_reduction <add>, %144, %cst_66 [0] : vector<8x8x128xf32> to vector<8x128xf32>
    %146 = vector.shape_cast %145 : vector<8x128xf32> to vector<1x8x128xf32>
    %147 = tpu.reciprocal %146 {approx = true} : vector<1x8x128xf32> -> vector<1x8x128xf32>
    %148 = vector.broadcast %147 : vector<1x8x128xf32> to vector<8x8x128xf32>
    %149 = arith.mulf %144, %148 : vector<8x8x128xf32>
    %150 = vector.shape_cast %123 : vector<8x128xf32> to vector<8x1x128xf32>
    %151 = vector.broadcast %150 : vector<8x1x128xf32> to vector<8x8x128xf32>
    %152 = arith.mulf %149, %151 : vector<8x8x128xf32>
    %cst_67 = arith.constant dense<0.000000e+00> : vector<8x128xf32>
    %153 = vector.multi_reduction <add>, %152, %cst_67 [0] : vector<8x8x128xf32> to vector<8x128xf32>
    %154 = vector.shape_cast %127 : vector<8x128xf32> to vector<8x1x128xf32>
    %155 = vector.broadcast %154 : vector<8x1x128xf32> to vector<8x8x128xf32>
    %156 = arith.mulf %149, %155 : vector<8x8x128xf32>
    %cst_68 = arith.constant dense<0.000000e+00> : vector<8x128xf32>
    %157 = vector.multi_reduction <add>, %156, %cst_68 [0] : vector<8x8x128xf32> to vector<8x128xf32>
    %158 = tpu.concatenate %153, %157 in 1 : vector<8x128xf32>, vector<8x128xf32> -> vector<8x256xf32>
    %c1120 = arith.constant 1120 : index
    %c0_69 = arith.constant 0 : index
    %159 = vector.load %arg1[%c1120, %c0_69] : memref<1896x128xf32, #tpu.memory_space<vmem>>, vector<256x40xf32>
    %cst_70 = arith.constant dense<0.000000e+00> : vector<8x40xf32>
    %160 = tpu.matmul %158, %159, %cst_70 {dimension_numbers = #tpu.dot_dimension_numbers<[1], [0], [0], [1], [0, 0, 1, 1], [], []>} : vector<8x256xf32>, vector<256x40xf32>, vector<8x40xf32> -> vector<8x40xf32>
    %c1376 = arith.constant 1376 : index
    %c0_71 = arith.constant 0 : index
    %161 = vector.load %arg1[%c1376, %c0_71] : memref<1896x128xf32, #tpu.memory_space<vmem>>, vector<8x40xf32>
    %162 = arith.addf %160, %161 : vector<8x40xf32>
    %163 = arith.addf %103, %162 : vector<8x40xf32>
    %c1384 = arith.constant 1384 : index
    %c0_72 = arith.constant 0 : index
    %164 = vector.load %arg1[%c1384, %c0_72] : memref<1896x128xf32, #tpu.memory_space<vmem>>, vector<8x40xf32>
    %c1392 = arith.constant 1392 : index
    %c0_73 = arith.constant 0 : index
    %165 = vector.load %arg1[%c1392, %c0_73] : memref<1896x128xf32, #tpu.memory_space<vmem>>, vector<8x40xf32>
    %cst_74 = arith.constant dense<0.000000e+00> : vector<8x40xf32>
    %166 = tpu.matmul %163, %2, %cst_74 {dimension_numbers = #tpu.dot_dimension_numbers<[1], [0], [0], [1], [0, 0, 1, 1], [], []>} : vector<8x40xf32>, vector<40x40xf32>, vector<8x40xf32> -> vector<8x40xf32>
    %167 = arith.subf %163, %166 : vector<8x40xf32>
    %168 = arith.mulf %167, %167 : vector<8x40xf32>
    %cst_75 = arith.constant dense<0.000000e+00> : vector<8x40xf32>
    %169 = tpu.matmul %168, %2, %cst_75 {dimension_numbers = #tpu.dot_dimension_numbers<[1], [0], [0], [1], [0, 0, 1, 1], [], []>} : vector<8x40xf32>, vector<40x40xf32>, vector<8x40xf32> -> vector<8x40xf32>
    %cst_76 = arith.constant 9.99999974E-6 : f32
    %170 = vector.broadcast %cst_76 : f32 to vector<8x40xf32>
    %171 = arith.addf %169, %170 : vector<8x40xf32>
    %172 = math.rsqrt %171 : vector<8x40xf32>
    %173 = arith.mulf %167, %172 : vector<8x40xf32>
    %174 = arith.mulf %173, %164 : vector<8x40xf32>
    %175 = arith.addf %174, %165 : vector<8x40xf32>
    %c1400 = arith.constant 1400 : index
    %c0_77 = arith.constant 0 : index
    %176 = vector.load %arg1[%c1400, %c0_77] : memref<1896x128xf32, #tpu.memory_space<vmem>>, vector<40x128xf32>
    %cst_78 = arith.constant dense<0.000000e+00> : vector<8x128xf32>
    %177 = tpu.matmul %175, %176, %cst_78 {dimension_numbers = #tpu.dot_dimension_numbers<[1], [0], [0], [1], [0, 0, 1, 1], [], []>} : vector<8x40xf32>, vector<40x128xf32>, vector<8x128xf32> -> vector<8x128xf32>
    %c1440 = arith.constant 1440 : index
    %c0_79 = arith.constant 0 : index
    %178 = vector.load %arg1[%c1440, %c0_79] : memref<1896x128xf32, #tpu.memory_space<vmem>>, vector<8x128xf32>
    %179 = arith.addf %177, %178 : vector<8x128xf32>
    %cst_80 = arith.constant 0.000000e+00 : f32
    %180 = vector.broadcast %cst_80 : f32 to vector<8x128xf32>
    %181 = arith.maximumf %179, %180 : vector<8x128xf32>
    %c1448 = arith.constant 1448 : index
    %c0_81 = arith.constant 0 : index
    %182 = vector.load %arg1[%c1448, %c0_81] : memref<1896x128xf32, #tpu.memory_space<vmem>>, vector<128x40xf32>
    %cst_82 = arith.constant dense<0.000000e+00> : vector<8x40xf32>
    %183 = tpu.matmul %181, %182, %cst_82 {dimension_numbers = #tpu.dot_dimension_numbers<[1], [0], [0], [1], [0, 0, 1, 1], [], []>} : vector<8x128xf32>, vector<128x40xf32>, vector<8x40xf32> -> vector<8x40xf32>
    %c1576 = arith.constant 1576 : index
    %c0_83 = arith.constant 0 : index
    %184 = vector.load %arg1[%c1576, %c0_83] : memref<1896x128xf32, #tpu.memory_space<vmem>>, vector<8x40xf32>
    %185 = arith.addf %183, %184 : vector<8x40xf32>
    %186 = arith.addf %175, %185 : vector<8x40xf32>
    %c1584 = arith.constant 1584 : index
    %c0_84 = arith.constant 0 : index
    %187 = vector.load %arg1[%c1584, %c0_84] : memref<1896x128xf32, #tpu.memory_space<vmem>>, vector<8x40xf32>
    %c1592 = arith.constant 1592 : index
    %c0_85 = arith.constant 0 : index
    %188 = vector.load %arg1[%c1592, %c0_85] : memref<1896x128xf32, #tpu.memory_space<vmem>>, vector<8x40xf32>
    %cst_86 = arith.constant dense<0.000000e+00> : vector<8x40xf32>
    %189 = tpu.matmul %186, %2, %cst_86 {dimension_numbers = #tpu.dot_dimension_numbers<[1], [0], [0], [1], [0, 0, 1, 1], [], []>} : vector<8x40xf32>, vector<40x40xf32>, vector<8x40xf32> -> vector<8x40xf32>
    %190 = arith.subf %186, %189 : vector<8x40xf32>
    %191 = arith.mulf %190, %190 : vector<8x40xf32>
    %cst_87 = arith.constant dense<0.000000e+00> : vector<8x40xf32>
    %192 = tpu.matmul %191, %2, %cst_87 {dimension_numbers = #tpu.dot_dimension_numbers<[1], [0], [0], [1], [0, 0, 1, 1], [], []>} : vector<8x40xf32>, vector<40x40xf32>, vector<8x40xf32> -> vector<8x40xf32>
    %cst_88 = arith.constant 9.99999974E-6 : f32
    %193 = vector.broadcast %cst_88 : f32 to vector<8x40xf32>
    %194 = arith.addf %192, %193 : vector<8x40xf32>
    %195 = math.rsqrt %194 : vector<8x40xf32>
    %196 = arith.mulf %190, %195 : vector<8x40xf32>
    %197 = arith.mulf %196, %187 : vector<8x40xf32>
    %198 = arith.addf %197, %188 : vector<8x40xf32>
    %cst_89 = arith.constant dense<0.000000e+00> : vector<2x40xf32>
    %199 = tpu.matmul %1, %198, %cst_89 {dimension_numbers = #tpu.dot_dimension_numbers<[1], [0], [0], [1], [0, 0, 1, 1], [], []>} : vector<2x8xf32>, vector<8x40xf32>, vector<2x40xf32> -> vector<2x40xf32>
    %c1600 = arith.constant 1600 : index
    %c0_90 = arith.constant 0 : index
    %200 = vector.load %arg1[%c1600, %c0_90] : memref<1896x128xf32, #tpu.memory_space<vmem>>, vector<40x64xf32>
    %cst_91 = arith.constant dense<0.000000e+00> : vector<2x64xf32>
    %201 = tpu.matmul %199, %200, %cst_91 {dimension_numbers = #tpu.dot_dimension_numbers<[1], [0], [0], [1], [0, 0, 1, 1], [], []>} : vector<2x40xf32>, vector<40x64xf32>, vector<2x64xf32> -> vector<2x64xf32>
    %c1640 = arith.constant 1640 : index
    %c0_92 = arith.constant 0 : index
    %202 = vector.load %arg1[%c1640, %c0_92] : memref<1896x128xf32, #tpu.memory_space<vmem>>, vector<2x64xf32>
    %203 = arith.addf %201, %202 : vector<2x64xf32>
    %c1648 = arith.constant 1648 : index
    %c0_93 = arith.constant 0 : index
    %204 = vector.load %arg1[%c1648, %c0_93] : memref<1896x128xf32, #tpu.memory_space<vmem>>, vector<64x128xf32>
    %cst_94 = arith.constant dense<0.000000e+00> : vector<2x128xf32>
    %205 = tpu.matmul %203, %204, %cst_94 {dimension_numbers = #tpu.dot_dimension_numbers<[1], [0], [0], [1], [0, 0, 1, 1], [], []>} : vector<2x64xf32>, vector<64x128xf32>, vector<2x128xf32> -> vector<2x128xf32>
    %c1712 = arith.constant 1712 : index
    %c0_95 = arith.constant 0 : index
    %206 = vector.load %arg1[%c1712, %c0_95] : memref<1896x128xf32, #tpu.memory_space<vmem>>, vector<2x128xf32>
    %207 = arith.addf %205, %206 : vector<2x128xf32>
    %cst_96 = arith.constant 0.000000e+00 : f32
    %208 = vector.broadcast %cst_96 : f32 to vector<2x128xf32>
    %209 = arith.maximumf %207, %208 : vector<2x128xf32>
    %c1720 = arith.constant 1720 : index
    %c0_97 = arith.constant 0 : index
    %210 = vector.load %arg1[%c1720, %c0_97] : memref<1896x128xf32, #tpu.memory_space<vmem>>, vector<128x32xf32>
    %cst_98 = arith.constant dense<0.000000e+00> : vector<2x32xf32>
    %211 = tpu.matmul %209, %210, %cst_98 {dimension_numbers = #tpu.dot_dimension_numbers<[1], [0], [0], [1], [0, 0, 1, 1], [], []>} : vector<2x128xf32>, vector<128x32xf32>, vector<2x32xf32> -> vector<2x32xf32>
    %c1848 = arith.constant 1848 : index
    %c0_99 = arith.constant 0 : index
    %212 = vector.load %arg1[%c1848, %c0_99] : memref<1896x128xf32, #tpu.memory_space<vmem>>, vector<2x32xf32>
    %213 = arith.addf %211, %212 : vector<2x32xf32>
    %cst_100 = arith.constant 0.000000e+00 : f32
    %214 = vector.broadcast %cst_100 : f32 to vector<2x32xf32>
    %215 = arith.maximumf %213, %214 : vector<2x32xf32>
    %c1856 = arith.constant 1856 : index
    %c0_101 = arith.constant 0 : index
    %216 = vector.load %arg1[%c1856, %c0_101] : memref<1896x128xf32, #tpu.memory_space<vmem>>, vector<32x2xf32>
    %cst_102 = arith.constant dense<0.000000e+00> : vector<2x2xf32>
    %217 = tpu.matmul %215, %216, %cst_102 {dimension_numbers = #tpu.dot_dimension_numbers<[1], [0], [0], [1], [0, 0, 1, 1], [], []>} : vector<2x32xf32>, vector<32x2xf32>, vector<2x2xf32> -> vector<2x2xf32>
    %c1888 = arith.constant 1888 : index
    %c0_103 = arith.constant 0 : index
    %218 = vector.load %arg1[%c1888, %c0_103] : memref<1896x128xf32, #tpu.memory_space<vmem>>, vector<2x2xf32>
    %219 = arith.addf %217, %218 : vector<2x2xf32>
    %c0_104 = arith.constant 0 : index
    %c0_105 = arith.constant 0 : index
    %220 = vector.load %arg2[%c0_104, %c0_105] : memref<2x2xf32, #tpu.memory_space<vmem>>, vector<2x2xf32>
    tpu.vector_store %arg2[%c0_104, %c0_105], %219 {strides = array<i32>} : memref<2x2xf32, #tpu.memory_space<vmem>>, vector<2x2xf32>,
    return
  }
}

</mosaic_0001>

<llo_original>
// kernel: transformer_forward.1
$region0: #{transformer_forward.1}
  #allocation0 [shape = 'u32[]', space=smem, size = 0x4, offset = 0x4, fixed_abs, tag = 'smem constant byte address 0x4 - core index']
  #allocation1 [shape = 'u32[72,128]{1,0:T(1,128)}', space=vmem, size = 0x9000, scoped, tag = 'internal scratch']
  %s0 = inlined_call_operand.vmem [shape: f32[8,40], index: 0, kind: input, shape index: {}]
  %s1 = inlined_call_operand.hbm [shape: f32[1896,128], index: 1, kind: input, shape index: {}]
  %s2 = inlined_call_operand.hbm [shape: f32[2,2], index: 2, kind: output, shape index: {}]
  %s3 = sld [smem:[#allocation0]]
  $region22: #{transformer_forward.1} parent=0
    _
  %s5 = ssub.s32 1, %s3
  %s6 = scalar_select 0, %s5, %s3
  $region1: #{transformer_forward.1} parent=0
    #allocation2 [shape = 'u8[970752]{0}', space=vmem, size = 0xed000, scoped, tag = 'input window, operand 1, single buffered']
    #allocation3 [shape = 's32[1]{0}', space=sflag, size = 0x4, scoped, tag = 'scoped memory for transformer_forward.1']
    #allocation4 [shape = 's32[1]{0}', space=sflag, size = 0x4, scoped, tag = 'scoped memory for transformer_forward.1']
    #allocation5 [shape = 'u8[1024]{0}', space=vmem, size = 0x400, scoped, tag = 'output window, operand 0, single buffered']
    %7 = vsyncpa [#allocation3], 0
    %8 = vsyncpa [#allocation4], 0
    // Predicated region
    $region2: #{transformer_forward.1} parent=1 // pred_check
      _
    $region3: #{transformer_forward.1} parent=1 // pred_check_branch
      %10 = sbr.rel (0) target = $region5
    $region4: #{transformer_forward.1} parent=1 // pred_region
      _
    $region5: #{transformer_forward.1} parent=1 // pred_fallthru
      _
    // Predicated region
    $region6: #{transformer_forward.1} parent=1 // pred_check
      _
    $region7: #{transformer_forward.1} parent=1 // pred_check_branch
      %12 = sbr.rel (0) target = $region9
    $region8: #{transformer_forward.1} parent=1 // pred_region
      %14 = vsyncadd [#allocation3], 0
      %s15 = sshll.u32 %s1, 4
      %s16 = int_to_ptr.hbm [resolvable:$true] %s15
      %s17 = sshll.u32 [#allocation2], 4
      %s18 = int_to_ptr.vmem [resolvable:$true] %s17
      %23 = dma.hbm_to_vmem [thread:$0]  %s16, 30336, %s18, [#allocation3], 128, 128, 8
    $region9: #{transformer_forward.1} parent=1 // pred_fallthru
      _
    // Predicated region
    $region10: #{transformer_forward.1} parent=1 // pred_check
      _
    $region11: #{transformer_forward.1} parent=1 // pred_check_branch
      %25 = sbr.rel (0) target = $region13
    $region12: #{transformer_forward.1} parent=1 // pred_region
      %27 = dma.done [#allocation3], 30336
    $region13: #{transformer_forward.1} parent=1 // pred_fallthru
      _
    %v28 = vld [vmem:[#allocation2] sm:$0xff]
    %v29 = vld [vmem:[#allocation2 + $0x10] sm:$0x3]
    %v30 = vld [vmem:[#allocation2 + $0x18] sm:$0xff]
    %v31 = vld [vmem:[#allocation2 + $0x20] sm:$0xff]
    %v32 = vld [vmem:[#allocation2 + $0x28] sm:$0xff]
    %v33 = vld [vmem:[#allocation2 + $0x30] sm:$0xff]
    %v34 = vld [vmem:[#allocation2 + $0x38] sm:$0xff]
    %v35 = vld [vmem:[#allocation2 + $0x8] sm:$0xff]
    %v36 = vperm.slane %v35, 0
    %v37 = vlaneseq
    %v38 = vshrl.u32 %v37, 7
    %40 = vset.pattern.permute.xlu0 %v38
    %41 = vperm.xlu0 %40, %v36
    %v42 = vpop.permute.xlu0 %41
    %v43 = vperm.slane %v35, 1
    %v44 = vlaneseq
    %v45 = vshrl.u32 %v44, 7
    %47 = vset.pattern.permute.xlu0 %v45
    %48 = vperm.xlu0 %47, %v43
    %v49 = vpop.permute.xlu0 %48
    %v50 = vperm.slane %v35, 2
    %v51 = vlaneseq
    %v52 = vshrl.u32 %v51, 7
    %54 = vset.pattern.permute.xlu0 %v52
    %55 = vperm.xlu0 %54, %v50
    %v56 = vpop.permute.xlu0 %55
    %v57 = vperm.slane %v35, 3
    %v58 = vlaneseq
    %v59 = vshrl.u32 %v58, 7
    %61 = vset.pattern.permute.xlu0 %v59
    %62 = vperm.xlu0 %61, %v57
    %v63 = vpop.permute.xlu0 %62
    %v64 = vperm.slane %v35, 4
    %v65 = vlaneseq
    %v66 = vshrl.u32 %v65, 7
    %68 = vset.pattern.permute.xlu0 %v66
    %69 = vperm.xlu0 %68, %v64
    %v70 = vpop.permute.xlu0 %69
    %v71 = vperm.slane %v35, 5
    %v72 = vlaneseq
    %v73 = vshrl.u32 %v72, 7
    %75 = vset.pattern.permute.xlu0 %v73
    %76 = vperm.xlu0 %75, %v71
    %v77 = vpop.permute.xlu0 %76
    %v78 = vperm.slane %v35, 6
    %v79 = vlaneseq
    %v80 = vshrl.u32 %v79, 7
    %82 = vset.pattern.permute.xlu0 %v80
    %83 = vperm.xlu0 %82, %v78
    %v84 = vpop.permute.xlu0 %83
    %v85 = vperm.slane %v35, 7
    %v86 = vlaneseq
    %v87 = vshrl.u32 %v86, 7
    %89 = vset.pattern.permute.xlu0 %v87
    %90 = vperm.xlu0 %89, %v85
    %v91 = vpop.permute.xlu0 %90
    %v92 = vld [vmem:[%s0] sm:$0xff]
    %v93 = vadd.f32 %v92, %v28
    %v94 = vld [vmem:[#allocation2 + $0x40] sm:$0xff]
    %v95 = vld [vmem:[#allocation2 + $0x48] sm:$0xff]
    %v96 = vld [vmem:[#allocation2 + $0x50] sm:$0xff]
    %v97 = vld [vmem:[#allocation2 + $0x58] sm:$0xff]
    %v98 = vld [vmem:[#allocation2 + $0x60] sm:$0xff]
    %v99 = vld [vmem:[#allocation2 + $0x130] sm:$0xff]
    %vm100 = vcmask 326656
    %v102 = vsel %vm100, %v93, 0
    %104 = vmatpush.msra.mxu0 0.0
    %105 = vmatpush.msra.mxu0 0.0
    %106 = vmatpush.msra.mxu0 0.0
    %107 = vmatpush.msra.mxu0 0.0
    %108 = vmatpush.msra.mxu0 0.0
    %109 = vmatpush.msra.mxu0 0.0
    %110 = vmatpush.msra.mxu0 0.0
    %111 = vmatpush.msra.mxu0 0.0
    %112 = vmatpush.msra.mxu0 0.0
    %113 = vmatpush.msra.mxu0 0.0
    %114 = vmatpush.msra.mxu0 0.0
    %115 = vmatpush.msra.mxu0 %v98
    %116 = vmatpush.msra.mxu0 %v97
    %117 = vmatpush.msra.mxu0 %v96
    %118 = vmatpush.msra.mxu0 %v95
    %119 = vmatpush.msra.mxu0 %v94
    %120 = vmatmul.f32.gmra.mxu0 %v102
    %v121 = vpop.f32.mrf.mxu0
    %v122 = vadd.f32 %v99, %v121
    %123 = vdwg.mxu0
    %v124 = vld [vmem:[#allocation2 + $0x68] sm:$0xff]
    %v125 = vld [vmem:[#allocation2 + $0x70] sm:$0xff]
    %v126 = vld [vmem:[#allocation2 + $0x78] sm:$0xff]
    %v127 = vld [vmem:[#allocation2 + $0x80] sm:$0xff]
    %v128 = vld [vmem:[#allocation2 + $0x88] sm:$0xff]
    %v129 = vld [vmem:[#allocation2 + $0x138] sm:$0xff]
    %130 = vmatpush.msra.mxu0 0.0
    %131 = vmatpush.msra.mxu0 0.0
    %132 = vmatpush.msra.mxu0 0.0
    %133 = vmatpush.msra.mxu0 0.0
    %134 = vmatpush.msra.mxu0 0.0
    %135 = vmatpush.msra.mxu0 0.0
    %136 = vmatpush.msra.mxu0 0.0
    %137 = vmatpush.msra.mxu0 0.0
    %138 = vmatpush.msra.mxu0 0.0
    %139 = vmatpush.msra.mxu0 0.0
    %140 = vmatpush.msra.mxu0 0.0
    %141 = vmatpush.msra.mxu0 %v128
    %142 = vmatpush.msra.mxu0 %v127
    %143 = vmatpush.msra.mxu0 %v126
    %144 = vmatpush.msra.mxu0 %v125
    %145 = vmatpush.msra.mxu0 %v124
    %146 = vmatmul.f32.gmra.mxu0 %v102
    %v147 = vpop.f32.mrf.mxu0
    %v148 = vadd.f32 %v129, %v147
    %149 = vdwg.mxu0
    %v150 = vld [vmem:[#allocation2 + $0x90] sm:$0xff]
    %v151 = vld [vmem:[#allocation2 + $0x98] sm:$0xff]
    %v152 = vld [vmem:[#allocation2 + $0xa0] sm:$0xff]
    %v153 = vld [vmem:[#allocation2 + $0xa8] sm:$0xff]
    %v154 = vld [vmem:[#allocation2 + $0xb0] sm:$0xff]
    %v155 = vld [vmem:[#allocation2 + $0x140] sm:$0xff]
    %156 = vmatpush.msra.mxu0 0.0
    %157 = vmatpush.msra.mxu0 0.0
    %158 = vmatpush.msra.mxu0 0.0
    %159 = vmatpush.msra.mxu0 0.0
    %160 = vmatpush.msra.mxu0 0.0
    %161 = vmatpush.msra.mxu0 0.0
    %162 = vmatpush.msra.mxu0 0.0
    %163 = vmatpush.msra.mxu0 0.0
    %164 = vmatpush.msra.mxu0 0.0
    %165 = vmatpush.msra.mxu0 0.0
    %166 = vmatpush.msra.mxu0 0.0
    %167 = vmatpush.msra.mxu0 %v154
    %168 = vmatpush.msra.mxu0 %v153
    %169 = vmatpush.msra.mxu0 %v152
    %170 = vmatpush.msra.mxu0 %v151
    %171 = vmatpush.msra.mxu0 %v150
    %172 = vmatmul.f32.gmra.mxu0 %v102
    %v173 = vpop.f32.mrf.mxu0
    %v174 = vadd.f32 %v155, %v173
    %175 = vdwg.mxu0
    %v176 = vld [vmem:[#allocation2 + $0xb8] sm:$0xff]
    %v177 = vld [vmem:[#allocation2 + $0xc0] sm:$0xff]
    %v178 = vld [vmem:[#allocation2 + $0xc8] sm:$0xff]
    %v179 = vld [vmem:[#allocation2 + $0xd0] sm:$0xff]
    %v180 = vld [vmem:[#allocation2 + $0xd8] sm:$0xff]
    %v181 = vld [vmem:[#allocation2 + $0x148] sm:$0xff]
    %182 = vmatpush.msra.mxu0 0.0
    %183 = vmatpush.msra.mxu0 0.0
    %184 = vmatpush.msra.mxu0 0.0
    %185 = vmatpush.msra.mxu0 0.0
    %186 = vmatpush.msra.mxu0 0.0
    %187 = vmatpush.msra.mxu0 0.0
    %188 = vmatpush.msra.mxu0 0.0
    %189 = vmatpush.msra.mxu0 0.0
    %190 = vmatpush.msra.mxu0 0.0
    %191 = vmatpush.msra.mxu0 0.0
    %192 = vmatpush.msra.mxu0 0.0
    %193 = vmatpush.msra.mxu0 %v180
    %194 = vmatpush.msra.mxu0 %v179
    %195 = vmatpush.msra.mxu0 %v178
    %196 = vmatpush.msra.mxu0 %v177
    %197 = vmatpush.msra.mxu0 %v176
    %198 = vmatmul.f32.gmra.mxu0 %v102
    %v199 = vpop.f32.mrf.mxu0
    %v200 = vadd.f32 %v181, %v199
    %201 = vdwg.mxu0
    %v202 = vld [vmem:[#allocation2 + $0xe0] sm:$0xff]
    %v203 = vld [vmem:[#allocation2 + $0xe8] sm:$0xff]
    %v204 = vld [vmem:[#allocation2 + $0xf0] sm:$0xff]
    %v205 = vld [vmem:[#allocation2 + $0xf8] sm:$0xff]
    %v206 = vld [vmem:[#allocation2 + $0x100] sm:$0xff]
    %v207 = vld [vmem:[#allocation2 + $0x150] sm:$0xff]
    %208 = vmatpush.msra.mxu0 0.0
    %209 = vmatpush.msra.mxu0 0.0
    %210 = vmatpush.msra.mxu0 0.0
    %211 = vmatpush.msra.mxu0 0.0
    %212 = vmatpush.msra.mxu0 0.0
    %213 = vmatpush.msra.mxu0 0.0
    %214 = vmatpush.msra.mxu0 0.0
    %215 = vmatpush.msra.mxu0 0.0
    %216 = vmatpush.msra.mxu0 0.0
    %217 = vmatpush.msra.mxu0 0.0
    %218 = vmatpush.msra.mxu0 0.0
    %219 = vmatpush.msra.mxu0 %v206
    %220 = vmatpush.msra.mxu0 %v205
    %221 = vmatpush.msra.mxu0 %v204
    %222 = vmatpush.msra.mxu0 %v203
    %223 = vmatpush.msra.mxu0 %v202
    %224 = vmatmul.f32.gmra.mxu0 %v102
    %v225 = vpop.f32.mrf.mxu0
    %v226 = vadd.f32 %v207, %v225
    %227 = vdwg.mxu0
    %v228 = vld [vmem:[#allocation2 + $0x108] sm:$0xff]
    %v229 = vld [vmem:[#allocation2 + $0x110] sm:$0xff]
    %v230 = vld [vmem:[#allocation2 + $0x118] sm:$0xff]
    %v231 = vld [vmem:[#allocation2 + $0x120] sm:$0xff]
    %v232 = vld [vmem:[#allocation2 + $0x128] sm:$0xff]
    %v233 = vld [vmem:[#allocation2 + $0x158] sm:$0xff]
    %234 = vmatpush.msra.mxu0 0.0
    %235 = vmatpush.msra.mxu0 0.0
    %236 = vmatpush.msra.mxu0 0.0
    %237 = vmatpush.msra.mxu0 0.0
    %238 = vmatpush.msra.mxu0 0.0
    %239 = vmatpush.msra.mxu0 0.0
    %240 = vmatpush.msra.mxu0 0.0
    %241 = vmatpush.msra.mxu0 0.0
    %242 = vmatpush.msra.mxu0 0.0
    %243 = vmatpush.msra.mxu0 0.0
    %244 = vmatpush.msra.mxu0 0.0
    %245 = vmatpush.msra.mxu0 %v232
    %246 = vmatpush.msra.mxu0 %v231
    %247 = vmatpush.msra.mxu0 %v230
    %248 = vmatpush.msra.mxu0 %v229
    %249 = vmatpush.msra.mxu0 %v228
    %250 = vmatmul.f32.gmra.mxu0 %v102
    %v251 = vpop.f32.mrf.mxu0
    %v252 = vadd.f32 %v233, %v251
    %253 = vdwg.mxu0
    %v255 = vrot.slane %v174, 1
    %v256 = vrot.slane %v174, 2
    %v257 = vrot.slane %v174, 3
    %v258 = vrot.slane %v174, 4
    %v259 = vrot.slane %v174, 5
    %v260 = vrot.slane %v174, 6
    %v261 = vrot.slane %v174, 7
    %v262 = vperm.slane %v174, 0
    %v263 = vperm.slane %v255, 0
    %v264 = vperm.slane %v256, 0
    %v265 = vperm.slane %v257, 0
    %v266 = vperm.slane %v258, 0
    %v267 = vperm.slane %v259, 0
    %v268 = vperm.slane %v260, 0
    %v269 = vperm.slane %v261, 0
    %v278 = vmul.f32 %v262, %v122
    %v279 = vmul.f32 %v263, %v122
    %v280 = vmul.f32 %v264, %v122
    %v281 = vmul.f32 %v265, %v122
    %v282 = vmul.f32 %v266, %v122
    %v283 = vmul.f32 %v267, %v122
    %v284 = vmul.f32 %v268, %v122
    %v285 = vmul.f32 %v269, %v122
    %v287 = vrot.slane %v200, 1
    %v288 = vrot.slane %v200, 2
    %v289 = vrot.slane %v200, 3
    %v290 = vrot.slane %v200, 4
    %v291 = vrot.slane %v200, 5
    %v292 = vrot.slane %v200, 6
    %v293 = vrot.slane %v200, 7
    %v294 = vperm.slane %v200, 0
    %v295 = vperm.slane %v287, 0
    %v296 = vperm.slane %v288, 0
    %v297 = vperm.slane %v289, 0
    %v298 = vperm.slane %v290, 0
    %v299 = vperm.slane %v291, 0
    %v300 = vperm.slane %v292, 0
    %v301 = vperm.slane %v293, 0
    %v310 = vmul.f32 %v294, %v148
    %v311 = vmul.f32 %v295, %v148
    %v312 = vmul.f32 %v296, %v148
    %v313 = vmul.f32 %v297, %v148
    %v314 = vmul.f32 %v298, %v148
    %v315 = vmul.f32 %v299, %v148
    %v316 = vmul.f32 %v300, %v148
    %v317 = vmul.f32 %v301, %v148
    %v318 = vadd.f32 %v278, %v310
    %v319 = vadd.f32 %v279, %v311
    %v320 = vadd.f32 %v280, %v312
    %v321 = vadd.f32 %v281, %v313
    %v322 = vadd.f32 %v282, %v314
    %v323 = vadd.f32 %v283, %v315
    %v324 = vadd.f32 %v284, %v316
    %v325 = vadd.f32 %v285, %v317
    %v326 = vadd.f32 %v318, %v42
    %v327 = vadd.f32 %v319, %v49
    %v328 = vadd.f32 %v320, %v56
    %v329 = vadd.f32 %v321, %v63
    %v330 = vadd.f32 %v322, %v70
    %v331 = vadd.f32 %v323, %v77
    %v332 = vadd.f32 %v324, %v84
    %v333 = vadd.f32 %v325, %v91
    %v334 = vmax.f32 %v326, %v330
    %v335 = vmax.f32 %v327, %v331
    %v336 = vmax.f32 %v328, %v332
    %v337 = vmax.f32 %v329, %v333
    %v338 = vmax.f32 %v334, %v335
    %v339 = vmax.f32 %v336, %v337
    %v340 = vmax.f32 %v338, %v339
    %v341 = vsub.f32 %v326, %v340
    %v342 = vsub.f32 %v327, %v340
    %v343 = vsub.f32 %v328, %v340
    %v344 = vsub.f32 %v329, %v340
    %v345 = vsub.f32 %v330, %v340
    %v346 = vsub.f32 %v331, %v340
    %v347 = vsub.f32 %v332, %v340
    %v348 = vsub.f32 %v333, %v340
    %v349 = vmul.f32 %v341, 1.442695
    %v350 = vpow.pop %v349
    %v351 = vmul.f32 %v342, 1.442695
    %v352 = vpow.pop %v351
    %v353 = vmul.f32 %v343, 1.442695
    %v354 = vpow.pop %v353
    %v355 = vmul.f32 %v344, 1.442695
    %v356 = vpow.pop %v355
    %v357 = vmul.f32 %v345, 1.442695
    %v358 = vpow.pop %v357
    %v359 = vmul.f32 %v346, 1.442695
    %v360 = vpow.pop %v359
    %v361 = vmul.f32 %v347, 1.442695
    %v362 = vpow.pop %v361
    %v363 = vmul.f32 %v348, 1.442695
    %v364 = vpow.pop %v363
    %v365 = vadd.f32 %v350, %v352
    %v366 = vadd.f32 %v365, %v354
    %v367 = vadd.f32 %v366, %v356
    %v368 = vadd.f32 %v367, %v358
    %v369 = vadd.f32 %v368, %v360
    %v370 = vadd.f32 %v369, %v362
    %v371 = vadd.f32 %v370, %v364
    %v372 = vrcp.pop %v371
    %v373 = vmul.f32 %v350, %v372
    %v374 = vmul.f32 %v352, %v372
    %v375 = vmul.f32 %v354, %v372
    %v376 = vmul.f32 %v356, %v372
    %v377 = vmul.f32 %v358, %v372
    %v378 = vmul.f32 %v360, %v372
    %v379 = vmul.f32 %v362, %v372
    %v380 = vmul.f32 %v364, %v372
    %v382 = vrot.slane %v226, 1
    %v383 = vrot.slane %v226, 2
    %v384 = vrot.slane %v226, 3
    %v385 = vrot.slane %v226, 4
    %v386 = vrot.slane %v226, 5
    %v387 = vrot.slane %v226, 6
    %v388 = vrot.slane %v226, 7
    %v389 = vperm.slane %v226, 0
    %v390 = vperm.slane %v382, 0
    %v391 = vperm.slane %v383, 0
    %v392 = vperm.slane %v384, 0
    %v393 = vperm.slane %v385, 0
    %v394 = vperm.slane %v386, 0
    %v395 = vperm.slane %v387, 0
    %v396 = vperm.slane %v388, 0
    %v405 = vmul.f32 %v373, %v389
    %v406 = vmul.f32 %v374, %v390
    %v407 = vmul.f32 %v375, %v391
    %v408 = vmul.f32 %v376, %v392
    %v409 = vmul.f32 %v377, %v393
    %v410 = vmul.f32 %v378, %v394
    %v411 = vmul.f32 %v379, %v395
    %v412 = vmul.f32 %v380, %v396
    %v413 = vadd.f32 %v405, %v406
    %v414 = vadd.f32 %v413, %v407
    %v415 = vadd.f32 %v414, %v408
    %v416 = vadd.f32 %v415, %v409
    %v417 = vadd.f32 %v416, %v410
    %v418 = vadd.f32 %v417, %v411
    %v419 = vadd.f32 %v418, %v412
    %v421 = vrot.slane %v252, 1
    %v422 = vrot.slane %v252, 2
    %v423 = vrot.slane %v252, 3
    %v424 = vrot.slane %v252, 4
    %v425 = vrot.slane %v252, 5
    %v426 = vrot.slane %v252, 6
    %v427 = vrot.slane %v252, 7
    %v428 = vperm.slane %v252, 0
    %v429 = vperm.slane %v421, 0
    %v430 = vperm.slane %v422, 0
    %v431 = vperm.slane %v423, 0
    %v432 = vperm.slane %v424, 0
    %v433 = vperm.slane %v425, 0
    %v434 = vperm.slane %v426, 0
    %v435 = vperm.slane %v427, 0
    %v444 = vmul.f32 %v373, %v428
    %v445 = vmul.f32 %v374, %v429
    %v446 = vmul.f32 %v375, %v430
    %v447 = vmul.f32 %v376, %v431
    %v448 = vmul.f32 %v377, %v432
    %v449 = vmul.f32 %v378, %v433
    %v450 = vmul.f32 %v379, %v434
    %v451 = vmul.f32 %v380, %v435
    %v452 = vadd.f32 %v444, %v445
    %v453 = vadd.f32 %v452, %v446
    %v454 = vadd.f32 %v453, %v447
    %v455 = vadd.f32 %v454, %v448
    %v456 = vadd.f32 %v455, %v449
    %v457 = vadd.f32 %v456, %v450
    %v458 = vadd.f32 %v457, %v451
    %v459 = vld [vmem:[#allocation2 + $0x160] sm:$0xff]
    %v460 = vld [vmem:[#allocation2 + $0x168] sm:$0xff]
    %v461 = vld [vmem:[#allocation2 + $0x170] sm:$0xff]
    %v462 = vld [vmem:[#allocation2 + $0x178] sm:$0xff]
    %v463 = vld [vmem:[#allocation2 + $0x180] sm:$0xff]
    %v464 = vld [vmem:[#allocation2 + $0x188] sm:$0xff]
    %v465 = vld [vmem:[#allocation2 + $0x190] sm:$0xff]
    %v466 = vld [vmem:[#allocation2 + $0x198] sm:$0xff]
    %v467 = vld [vmem:[#allocation2 + $0x1a0] sm:$0xff]
    %v468 = vld [vmem:[#allocation2 + $0x1a8] sm:$0xff]
    %v469 = vld [vmem:[#allocation2 + $0x1b0] sm:$0xff]
    %v470 = vld [vmem:[#allocation2 + $0x1b8] sm:$0xff]
    %v471 = vld [vmem:[#allocation2 + $0x1c0] sm:$0xff]
    %v472 = vld [vmem:[#allocation2 + $0x1c8] sm:$0xff]
    %v473 = vld [vmem:[#allocation2 + $0x1d0] sm:$0xff]
    %v474 = vld [vmem:[#allocation2 + $0x1d8] sm:$0xff]
    %v475 = vld [vmem:[#allocation2 + $0x1e0] sm:$0xff]
    %v476 = vld [vmem:[#allocation2 + $0x1e8] sm:$0xff]
    %v477 = vld [vmem:[#allocation2 + $0x1f0] sm:$0xff]
    %v478 = vld [vmem:[#allocation2 + $0x1f8] sm:$0xff]
    %v479 = vld [vmem:[#allocation2 + $0x200] sm:$0xff]
    %v480 = vld [vmem:[#allocation2 + $0x208] sm:$0xff]
    %v481 = vld [vmem:[#allocation2 + $0x210] sm:$0xff]
    %v482 = vld [vmem:[#allocation2 + $0x218] sm:$0xff]
    %v483 = vld [vmem:[#allocation2 + $0x220] sm:$0xff]
    %v484 = vld [vmem:[#allocation2 + $0x228] sm:$0xff]
    %v485 = vld [vmem:[#allocation2 + $0x230] sm:$0xff]
    %v486 = vld [vmem:[#allocation2 + $0x238] sm:$0xff]
    %v487 = vld [vmem:[#allocation2 + $0x240] sm:$0xff]
    %v488 = vld [vmem:[#allocation2 + $0x248] sm:$0xff]
    %v489 = vld [vmem:[#allocation2 + $0x250] sm:$0xff]
    %v490 = vld [vmem:[#allocation2 + $0x258] sm:$0xff]
    %v491 = vld [vmem:[#allocation2 + $0x260] sm:$0xff]
    %492 = vmatpush.msra.mxu0 %v474
    %493 = vmatpush.msra.mxu0 %v473
    %494 = vmatpush.msra.mxu0 %v472
    %495 = vmatpush.msra.mxu0 %v471
    %496 = vmatpush.msra.mxu0 %v470
    %497 = vmatpush.msra.mxu0 %v469
    %498 = vmatpush.msra.mxu0 %v468
    %499 = vmatpush.msra.mxu0 %v467
    %500 = vmatpush.msra.mxu0 %v466
    %501 = vmatpush.msra.mxu0 %v465
    %502 = vmatpush.msra.mxu0 %v464
    %503 = vmatpush.msra.mxu0 %v463
    %504 = vmatpush.msra.mxu0 %v462
    %505 = vmatpush.msra.mxu0 %v461
    %506 = vmatpush.msra.mxu0 %v460
    %507 = vmatpush.msra.mxu0 %v459
    %508 = vmatmul.f32.gmra.mxu0 %v419
    %v509 = vpop.f32.mrf.mxu0
    %v510 = vadd.f32 %v491, %v509
    %511 = vdwg.mxu0
    %512 = vmatpush.msra.mxu0 %v490
    %513 = vmatpush.msra.mxu0 %v489
    %514 = vmatpush.msra.mxu0 %v488
    %515 = vmatpush.msra.mxu0 %v487
    %516 = vmatpush.msra.mxu0 %v486
    %517 = vmatpush.msra.mxu0 %v485
    %518 = vmatpush.msra.mxu0 %v484
    %519 = vmatpush.msra.mxu0 %v483
    %520 = vmatpush.msra.mxu0 %v482
    %521 = vmatpush.msra.mxu0 %v481
    %522 = vmatpush.msra.mxu0 %v480
    %523 = vmatpush.msra.mxu0 %v479
    %524 = vmatpush.msra.mxu0 %v478
    %525 = vmatpush.msra.mxu0 %v477
    %526 = vmatpush.msra.mxu0 %v476
    %527 = vmatpush.msra.mxu0 %v475
    %528 = vmatmul.f32.gmra.mxu0 %v458
    %v529 = vpop.f32.mrf.mxu0
    %v530 = vadd.f32 %v510, %v529
    %531 = vdwg.mxu0
    %v532 = vadd.f32 %v93, %v530
    %v533 = vld [vmem:[#allocation2 + $0x268] sm:$0xff]
    %v534 = vld [vmem:[#allocation2 + $0x270] sm:$0xff]
    %v536 = vsel %vm100, %v532, 0
    %538 = vmatpush.msra.mxu0 0.0
    %539 = vmatpush.msra.mxu0 0.0
    %540 = vmatpush.msra.mxu0 0.0
    %541 = vmatpush.msra.mxu0 0.0
    %542 = vmatpush.msra.mxu0 0.0
    %543 = vmatpush.msra.mxu0 0.0
    %544 = vmatpush.msra.mxu0 0.0
    %545 = vmatpush.msra.mxu0 0.0
    %546 = vmatpush.msra.mxu0 0.0
    %547 = vmatpush.msra.mxu0 0.0
    %548 = vmatpush.msra.mxu0 0.0
    %549 = vmatpush.msra.mxu0 %v34
    %550 = vmatpush.msra.mxu0 %v33
    %551 = vmatpush.msra.mxu0 %v32
    %552 = vmatpush.msra.mxu0 %v31
    %553 = vmatpush.msra.mxu0 %v30
    %554 = vmatmul.f32.gmra.mxu0 %v536
    %v555 = vpop.f32.mrf.mxu0
    %v556 = vadd.f32 0.0, %v555
    %557 = vdwg.mxu0
    %v558 = vsub.f32 %v532, %v556
    %v559 = vmul.f32 %v558, %v558
    %v561 = vsel %vm100, %v559, 0
    %563 = vmatpush.msra.mxu0 0.0
    %564 = vmatpush.msra.mxu0 0.0
    %565 = vmatpush.msra.mxu0 0.0
    %566 = vmatpush.msra.mxu0 0.0
    %567 = vmatpush.msra.mxu0 0.0
    %568 = vmatpush.msra.mxu0 0.0
    %569 = vmatpush.msra.mxu0 0.0
    %570 = vmatpush.msra.mxu0 0.0
    %571 = vmatpush.msra.mxu0 0.0
    %572 = vmatpush.msra.mxu0 0.0
    %573 = vmatpush.msra.mxu0 0.0
    %574 = vmatpush.msra.mxu0 %v34
    %575 = vmatpush.msra.mxu0 %v33
    %576 = vmatpush.msra.mxu0 %v32
    %577 = vmatpush.msra.mxu0 %v31
    %578 = vmatpush.msra.mxu0 %v30
    %579 = vmatmul.f32.gmra.mxu0 %v561
    %v580 = vpop.f32.mrf.mxu0
    %v581 = vadd.f32 1e-05, %v580
    %582 = vdwg.mxu0
    %v583 = vrsqrt.pop %v581
    %v584 = vmul.f32 %v583, %v581
    %v585 = vmul.f32 %v584, %v583
    %v586 = vmul.f32 0.5, %v585
    %v587 = vsub.f32 1.5, %v586
    %v588 = vmul.f32 %v583, %v587
    %vm589 = vweird.f32 %v581
    %vm590 = vweird.f32 %v583
    %vm591 = vmor %vm589, %vm590
    %v592 = vsel %vm591, %v583, %v588
    %v593 = vmul.f32 %v558, %v592
    %v594 = vmul.f32 %v593, %v533
    %v595 = vadd.f32 %v594, %v534
    %v596 = vld [vmem:[#allocation2 + $0x278] sm:$0xff]
    %v597 = vld [vmem:[#allocation2 + $0x280] sm:$0xff]
    %v598 = vld [vmem:[#allocation2 + $0x288] sm:$0xff]
    %v599 = vld [vmem:[#allocation2 + $0x290] sm:$0xff]
    %v600 = vld [vmem:[#allocation2 + $0x298] sm:$0xff]
    %v601 = vld [vmem:[#allocation2 + $0x2a0] sm:$0xff]
    %v603 = vsel %vm100, %v595, 0
    %605 = vmatpush.msra.mxu0 0.0
    %606 = vmatpush.msra.mxu0 0.0
    %607 = vmatpush.msra.mxu0 0.0
    %608 = vmatpush.msra.mxu0 0.0
    %609 = vmatpush.msra.mxu0 0.0
    %610 = vmatpush.msra.mxu0 0.0
    %611 = vmatpush.msra.mxu0 0.0
    %612 = vmatpush.msra.mxu0 0.0
    %613 = vmatpush.msra.mxu0 0.0
    %614 = vmatpush.msra.mxu0 0.0
    %615 = vmatpush.msra.mxu0 0.0
    %616 = vmatpush.msra.mxu0 %v600
    %617 = vmatpush.msra.mxu0 %v599
    %618 = vmatpush.msra.mxu0 %v598
    %619 = vmatpush.msra.mxu0 %v597
    %620 = vmatpush.msra.mxu0 %v596
    %621 = vmatmul.f32.gmra.mxu0 %v603
    %v622 = vpop.f32.mrf.mxu0
    %v623 = vadd.f32 %v601, %v622
    %624 = vdwg.mxu0
    %v625 = vmax.f32 %v623, 0.0
    %v626 = vld [vmem:[#allocation2 + $0x2a8] sm:$0xff]
    %v627 = vld [vmem:[#allocation2 + $0x2b0] sm:$0xff]
    %v628 = vld [vmem:[#allocation2 + $0x2b8] sm:$0xff]
    %v629 = vld [vmem:[#allocation2 + $0x2c0] sm:$0xff]
    %v630 = vld [vmem:[#allocation2 + $0x2c8] sm:$0xff]
    %v631 = vld [vmem:[#allocation2 + $0x2d0] sm:$0xff]
    %v632 = vld [vmem:[#allocation2 + $0x2d8] sm:$0xff]
    %v633 = vld [vmem:[#allocation2 + $0x2e0] sm:$0xff]
    %v634 = vld [vmem:[#allocation2 + $0x2e8] sm:$0xff]
    %v635 = vld [vmem:[#allocation2 + $0x2f0] sm:$0xff]
    %v636 = vld [vmem:[#allocation2 + $0x2f8] sm:$0xff]
    %v637 = vld [vmem:[#allocation2 + $0x300] sm:$0xff]
    %v638 = vld [vmem:[#allocation2 + $0x308] sm:$0xff]
    %v639 = vld [vmem:[#allocation2 + $0x310] sm:$0xff]
    %v640 = vld [vmem:[#allocation2 + $0x318] sm:$0xff]
    %v641 = vld [vmem:[#allocation2 + $0x320] sm:$0xff]
    %v642 = vld [vmem:[#allocation2 + $0x328] sm:$0xff]
    %643 = vmatpush.msra.mxu0 %v641
    %644 = vmatpush.msra.mxu0 %v640
    %645 = vmatpush.msra.mxu0 %v639
    %646 = vmatpush.msra.mxu0 %v638
    %647 = vmatpush.msra.mxu0 %v637
    %648 = vmatpush.msra.mxu0 %v636
    %649 = vmatpush.msra.mxu0 %v635
    %650 = vmatpush.msra.mxu0 %v634
    %651 = vmatpush.msra.mxu0 %v633
    %652 = vmatpush.msra.mxu0 %v632
    %653 = vmatpush.msra.mxu0 %v631
    %654 = vmatpush.msra.mxu0 %v630
    %655 = vmatpush.msra.mxu0 %v629
    %656 = vmatpush.msra.mxu0 %v628
    %657 = vmatpush.msra.mxu0 %v627
    %658 = vmatpush.msra.mxu0 %v626
    %659 = vmatmul.f32.gmra.mxu0 %v625
    %v660 = vpop.f32.mrf.mxu0
    %v661 = vadd.f32 %v642, %v660
    %662 = vdwg.mxu0
    %v663 = vadd.f32 %v595, %v661
    %v664 = vld [vmem:[#allocation2 + $0x330] sm:$0xff]
    %v665 = vld [vmem:[#allocation2 + $0x338] sm:$0xff]
    %v667 = vsel %vm100, %v663, 0
    %669 = vmatpush.msra.mxu0 0.0
    %670 = vmatpush.msra.mxu0 0.0
    %671 = vmatpush.msra.mxu0 0.0
    %672 = vmatpush.msra.mxu0 0.0
    %673 = vmatpush.msra.mxu0 0.0
    %674 = vmatpush.msra.mxu0 0.0
    %675 = vmatpush.msra.mxu0 0.0
    %676 = vmatpush.msra.mxu0 0.0
    %677 = vmatpush.msra.mxu0 0.0
    %678 = vmatpush.msra.mxu0 0.0
    %679 = vmatpush.msra.mxu0 0.0
    %680 = vmatpush.msra.mxu0 %v34
    %681 = vmatpush.msra.mxu0 %v33
    %682 = vmatpush.msra.mxu0 %v32
    %683 = vmatpush.msra.mxu0 %v31
    %684 = vmatpush.msra.mxu0 %v30
    %685 = vmatmul.f32.gmra.mxu0 %v667
    %v686 = vpop.f32.mrf.mxu0
    %v687 = vadd.f32 0.0, %v686
    %688 = vdwg.mxu0
    %v689 = vsub.f32 %v663, %v687
    %v690 = vmul.f32 %v689, %v689
    %v692 = vsel %vm100, %v690, 0
    %694 = vmatpush.msra.mxu0 0.0
    %695 = vmatpush.msra.mxu0 0.0
    %696 = vmatpush.msra.mxu0 0.0
    %697 = vmatpush.msra.mxu0 0.0
    %698 = vmatpush.msra.mxu0 0.0
    %699 = vmatpush.msra.mxu0 0.0
    %700 = vmatpush.msra.mxu0 0.0
    %701 = vmatpush.msra.mxu0 0.0
    %702 = vmatpush.msra.mxu0 0.0
    %703 = vmatpush.msra.mxu0 0.0
    %704 = vmatpush.msra.mxu0 0.0
    %705 = vmatpush.msra.mxu0 %v34
    %706 = vmatpush.msra.mxu0 %v33
    %707 = vmatpush.msra.mxu0 %v32
    %708 = vmatpush.msra.mxu0 %v31
    %709 = vmatpush.msra.mxu0 %v30
    %710 = vmatmul.f32.gmra.mxu0 %v692
    %v711 = vpop.f32.mrf.mxu0
    %v712 = vadd.f32 1e-05, %v711
    %713 = vdwg.mxu0
    %v714 = vrsqrt.pop %v712
    %v715 = vmul.f32 %v714, %v712
    %v716 = vmul.f32 %v715, %v714
    %v717 = vmul.f32 0.5, %v716
    %v718 = vsub.f32 1.5, %v717
    %v719 = vmul.f32 %v714, %v718
    %vm720 = vweird.f32 %v712
    %vm721 = vweird.f32 %v714
    %vm722 = vmor %vm720, %vm721
    %v723 = vsel %vm722, %v714, %v719
    %v724 = vmul.f32 %v689, %v723
    %v725 = vmul.f32 %v724, %v664
    %v726 = vadd.f32 %v725, %v665
    %v727 = vld [vmem:[#allocation2 + $0x340] sm:$0xff]
    %v728 = vld [vmem:[#allocation2 + $0x348] sm:$0xff]
    %v729 = vld [vmem:[#allocation2 + $0x350] sm:$0xff]
    %v730 = vld [vmem:[#allocation2 + $0x358] sm:$0xff]
    %v731 = vld [vmem:[#allocation2 + $0x360] sm:$0xff]
    %v732 = vld [vmem:[#allocation2 + $0x430] sm:$0xff]
    %v734 = vsel %vm100, %v726, 0
    %736 = vmatpush.msra.mxu0 0.0
    %737 = vmatpush.msra.mxu0 0.0
    %738 = vmatpush.msra.mxu0 0.0
    %739 = vmatpush.msra.mxu0 0.0
    %740 = vmatpush.msra.mxu0 0.0
    %741 = vmatpush.msra.mxu0 0.0
    %742 = vmatpush.msra.mxu0 0.0
    %743 = vmatpush.msra.mxu0 0.0
    %744 = vmatpush.msra.mxu0 0.0
    %745 = vmatpush.msra.mxu0 0.0
    %746 = vmatpush.msra.mxu0 0.0
    %747 = vmatpush.msra.mxu0 %v731
    %748 = vmatpush.msra.mxu0 %v730
    %749 = vmatpush.msra.mxu0 %v729
    %750 = vmatpush.msra.mxu0 %v728
    %751 = vmatpush.msra.mxu0 %v727
    %752 = vmatmul.f32.gmra.mxu0 %v734
    %v753 = vpop.f32.mrf.mxu0
    %v754 = vadd.f32 %v732, %v753
    %755 = vdwg.mxu0
    %v756 = vld [vmem:[#allocation2 + $0x368] sm:$0xff]
    %v757 = vld [vmem:[#allocation2 + $0x370] sm:$0xff]
    %v758 = vld [vmem:[#allocation2 + $0x378] sm:$0xff]
    %v759 = vld [vmem:[#allocation2 + $0x380] sm:$0xff]
    %v760 = vld [vmem:[#allocation2 + $0x388] sm:$0xff]
    %v761 = vld [vmem:[#allocation2 + $0x438] sm:$0xff]
    %762 = vmatpush.msra.mxu0 0.0
    %763 = vmatpush.msra.mxu0 0.0
    %764 = vmatpush.msra.mxu0 0.0
    %765 = vmatpush.msra.mxu0 0.0
    %766 = vmatpush.msra.mxu0 0.0
    %767 = vmatpush.msra.mxu0 0.0
    %768 = vmatpush.msra.mxu0 0.0
    %769 = vmatpush.msra.mxu0 0.0
    %770 = vmatpush.msra.mxu0 0.0
    %771 = vmatpush.msra.mxu0 0.0
    %772 = vmatpush.msra.mxu0 0.0
    %773 = vmatpush.msra.mxu0 %v760
    %774 = vmatpush.msra.mxu0 %v759
    %775 = vmatpush.msra.mxu0 %v758
    %776 = vmatpush.msra.mxu0 %v757
    %777 = vmatpush.msra.mxu0 %v756
    %778 = vmatmul.f32.gmra.mxu0 %v734
    %v779 = vpop.f32.mrf.mxu0
    %v780 = vadd.f32 %v761, %v779
    %781 = vdwg.mxu0
    %v782 = vld [vmem:[#allocation2 + $0x390] sm:$0xff]
    %v783 = vld [vmem:[#allocation2 + $0x398] sm:$0xff]
    %v784 = vld [vmem:[#allocation2 + $0x3a0] sm:$0xff]
    %v785 = vld [vmem:[#allocation2 + $0x3a8] sm:$0xff]
    %v786 = vld [vmem:[#allocation2 + $0x3b0] sm:$0xff]
    %v787 = vld [vmem:[#allocation2 + $0x440] sm:$0xff]
    %788 = vmatpush.msra.mxu0 0.0
    %789 = vmatpush.msra.mxu0 0.0
    %790 = vmatpush.msra.mxu0 0.0
    %791 = vmatpush.msra.mxu0 0.0
    %792 = vmatpush.msra.mxu0 0.0
    %793 = vmatpush.msra.mxu0 0.0
    %794 = vmatpush.msra.mxu0 0.0
    %795 = vmatpush.msra.mxu0 0.0
    %796 = vmatpush.msra.mxu0 0.0
    %797 = vmatpush.msra.mxu0 0.0
    %798 = vmatpush.msra.mxu0 0.0
    %799 = vmatpush.msra.mxu0 %v786
    %800 = vmatpush.msra.mxu0 %v785
    %801 = vmatpush.msra.mxu0 %v784
    %802 = vmatpush.msra.mxu0 %v783
    %803 = vmatpush.msra.mxu0 %v782
    %804 = vmatmul.f32.gmra.mxu0 %v734
    %v805 = vpop.f32.mrf.mxu0
    %v806 = vadd.f32 %v787, %v805
    %807 = vdwg.mxu0
    %v808 = vld [vmem:[#allocation2 + $0x3b8] sm:$0xff]
    %v809 = vld [vmem:[#allocation2 + $0x3c0] sm:$0xff]
    %v810 = vld [vmem:[#allocation2 + $0x3c8] sm:$0xff]
    %v811 = vld [vmem:[#allocation2 + $0x3d0] sm:$0xff]
    %v812 = vld [vmem:[#allocation2 + $0x3d8] sm:$0xff]
    %v813 = vld [vmem:[#allocation2 + $0x448] sm:$0xff]
    %814 = vmatpush.msra.mxu0 0.0
    %815 = vmatpush.msra.mxu0 0.0
    %816 = vmatpush.msra.mxu0 0.0
    %817 = vmatpush.msra.mxu0 0.0
    %818 = vmatpush.msra.mxu0 0.0
    %819 = vmatpush.msra.mxu0 0.0
    %820 = vmatpush.msra.mxu0 0.0
    %821 = vmatpush.msra.mxu0 0.0
    %822 = vmatpush.msra.mxu0 0.0
    %823 = vmatpush.msra.mxu0 0.0
    %824 = vmatpush.msra.mxu0 0.0
    %825 = vmatpush.msra.mxu0 %v812
    %826 = vmatpush.msra.mxu0 %v811
    %827 = vmatpush.msra.mxu0 %v810
    %828 = vmatpush.msra.mxu0 %v809
    %829 = vmatpush.msra.mxu0 %v808
    %830 = vmatmul.f32.gmra.mxu0 %v734
    %v831 = vpop.f32.mrf.mxu0
    %v832 = vadd.f32 %v813, %v831
    %833 = vdwg.mxu0
    %v834 = vld [vmem:[#allocation2 + $0x3e0] sm:$0xff]
    %v835 = vld [vmem:[#allocation2 + $0x3e8] sm:$0xff]
    %v836 = vld [vmem:[#allocation2 + $0x3f0] sm:$0xff]
    %v837 = vld [vmem:[#allocation2 + $0x3f8] sm:$0xff]
    %v838 = vld [vmem:[#allocation2 + $0x400] sm:$0xff]
    %v839 = vld [vmem:[#allocation2 + $0x450] sm:$0xff]
    %840 = vmatpush.msra.mxu0 0.0
    %841 = vmatpush.msra.mxu0 0.0
    %842 = vmatpush.msra.mxu0 0.0
    %843 = vmatpush.msra.mxu0 0.0
    %844 = vmatpush.msra.mxu0 0.0
    %845 = vmatpush.msra.mxu0 0.0
    %846 = vmatpush.msra.mxu0 0.0
    %847 = vmatpush.msra.mxu0 0.0
    %848 = vmatpush.msra.mxu0 0.0
    %849 = vmatpush.msra.mxu0 0.0
    %850 = vmatpush.msra.mxu0 0.0
    %851 = vmatpush.msra.mxu0 %v838
    %852 = vmatpush.msra.mxu0 %v837
    %853 = vmatpush.msra.mxu0 %v836
    %854 = vmatpush.msra.mxu0 %v835
    %855 = vmatpush.msra.mxu0 %v834
    %856 = vmatmul.f32.gmra.mxu0 %v734
    %v857 = vpop.f32.mrf.mxu0
    %v858 = vadd.f32 %v839, %v857
    %859 = vdwg.mxu0
    %v860 = vld [vmem:[#allocation2 + $0x408] sm:$0xff]
    %v861 = vld [vmem:[#allocation2 + $0x410] sm:$0xff]
    %v862 = vld [vmem:[#allocation2 + $0x418] sm:$0xff]
    %v863 = vld [vmem:[#allocation2 + $0x420] sm:$0xff]
    %v864 = vld [vmem:[#allocation2 + $0x428] sm:$0xff]
    %v865 = vld [vmem:[#allocation2 + $0x458] sm:$0xff]
    %866 = vmatpush.msra.mxu0 0.0
    %867 = vmatpush.msra.mxu0 0.0
    %868 = vmatpush.msra.mxu0 0.0
    %869 = vmatpush.msra.mxu0 0.0
    %870 = vmatpush.msra.mxu0 0.0
    %871 = vmatpush.msra.mxu0 0.0
    %872 = vmatpush.msra.mxu0 0.0
    %873 = vmatpush.msra.mxu0 0.0
    %874 = vmatpush.msra.mxu0 0.0
    %875 = vmatpush.msra.mxu0 0.0
    %876 = vmatpush.msra.mxu0 0.0
    %877 = vmatpush.msra.mxu0 %v864
    %878 = vmatpush.msra.mxu0 %v863
    %879 = vmatpush.msra.mxu0 %v862
    %880 = vmatpush.msra.mxu0 %v861
    %881 = vmatpush.msra.mxu0 %v860
    %882 = vmatmul.f32.gmra.mxu0 %v734
    %v883 = vpop.f32.mrf.mxu0
    %v884 = vadd.f32 %v865, %v883
    %885 = vdwg.mxu0
    %v887 = vrot.slane %v806, 1
    %v888 = vrot.slane %v806, 2
    %v889 = vrot.slane %v806, 3
    %v890 = vrot.slane %v806, 4
    %v891 = vrot.slane %v806, 5
    %v892 = vrot.slane %v806, 6
    %v893 = vrot.slane %v806, 7
    %v894 = vperm.slane %v806, 0
    %v895 = vperm.slane %v887, 0
    %v896 = vperm.slane %v888, 0
    %v897 = vperm.slane %v889, 0
    %v898 = vperm.slane %v890, 0
    %v899 = vperm.slane %v891, 0
    %v900 = vperm.slane %v892, 0
    %v901 = vperm.slane %v893, 0
    %v910 = vmul.f32 %v894, %v754
    %v911 = vmul.f32 %v895, %v754
    %v912 = vmul.f32 %v896, %v754
    %v913 = vmul.f32 %v897, %v754
    %v914 = vmul.f32 %v898, %v754
    %v915 = vmul.f32 %v899, %v754
    %v916 = vmul.f32 %v900, %v754
    %v917 = vmul.f32 %v901, %v754
    %v919 = vrot.slane %v832, 1
    %v920 = vrot.slane %v832, 2
    %v921 = vrot.slane %v832, 3
    %v922 = vrot.slane %v832, 4
    %v923 = vrot.slane %v832, 5
    %v924 = vrot.slane %v832, 6
    %v925 = vrot.slane %v832, 7
    %v926 = vperm.slane %v832, 0
    %v927 = vperm.slane %v919, 0
    %v928 = vperm.slane %v920, 0
    %v929 = vperm.slane %v921, 0
    %v930 = vperm.slane %v922, 0
    %v931 = vperm.slane %v923, 0
    %v932 = vperm.slane %v924, 0
    %v933 = vperm.slane %v925, 0
    %v942 = vmul.f32 %v926, %v780
    %v943 = vmul.f32 %v927, %v780
    %v944 = vmul.f32 %v928, %v780
    %v945 = vmul.f32 %v929, %v780
    %v946 = vmul.f32 %v930, %v780
    %v947 = vmul.f32 %v931, %v780
    %v948 = vmul.f32 %v932, %v780
    %v949 = vmul.f32 %v933, %v780
    %v950 = vadd.f32 %v910, %v942
    %v951 = vadd.f32 %v911, %v943
    %v952 = vadd.f32 %v912, %v944
    %v953 = vadd.f32 %v913, %v945
    %v954 = vadd.f32 %v914, %v946
    %v955 = vadd.f32 %v915, %v947
    %v956 = vadd.f32 %v916, %v948
    %v957 = vadd.f32 %v917, %v949
    %v958 = vadd.f32 %v950, %v42
    %v959 = vadd.f32 %v951, %v49
    %v960 = vadd.f32 %v952, %v56
    %v961 = vadd.f32 %v953, %v63
    %v962 = vadd.f32 %v954, %v70
    %v963 = vadd.f32 %v955, %v77
    %v964 = vadd.f32 %v956, %v84
    %v965 = vadd.f32 %v957, %v91
    %v966 = vmax.f32 %v958, %v962
    %v967 = vmax.f32 %v959, %v963
    %v968 = vmax.f32 %v960, %v964
    %v969 = vmax.f32 %v961, %v965
    %v970 = vmax.f32 %v966, %v967
    %v971 = vmax.f32 %v968, %v969
    %v972 = vmax.f32 %v970, %v971
    %v973 = vsub.f32 %v958, %v972
    %v974 = vsub.f32 %v959, %v972
    %v975 = vsub.f32 %v960, %v972
    %v976 = vsub.f32 %v961, %v972
    %v977 = vsub.f32 %v962, %v972
    %v978 = vsub.f32 %v963, %v972
    %v979 = vsub.f32 %v964, %v972
    %v980 = vsub.f32 %v965, %v972
    %v981 = vmul.f32 %v973, 1.442695
    %v982 = vpow.pop %v981
    %v983 = vmul.f32 %v974, 1.442695
    %v984 = vpow.pop %v983
    %v985 = vmul.f32 %v975, 1.442695
    %v986 = vpow.pop %v985
    %v987 = vmul.f32 %v976, 1.442695
    %v988 = vpow.pop %v987
    %v989 = vmul.f32 %v977, 1.442695
    %v990 = vpow.pop %v989
    %v991 = vmul.f32 %v978, 1.442695
    %v992 = vpow.pop %v991
    %v993 = vmul.f32 %v979, 1.442695
    %v994 = vpow.pop %v993
    %v995 = vmul.f32 %v980, 1.442695
    %v996 = vpow.pop %v995
    %v997 = vadd.f32 %v982, %v984
    %v998 = vadd.f32 %v997, %v986
    %v999 = vadd.f32 %v998, %v988
    %v1000 = vadd.f32 %v999, %v990
    %v1001 = vadd.f32 %v1000, %v992
    %v1002 = vadd.f32 %v1001, %v994
    %v1003 = vadd.f32 %v1002, %v996
    %v1004 = vrcp.pop %v1003
    %v1005 = vmul.f32 %v982, %v1004
    %v1006 = vmul.f32 %v984, %v1004
    %v1007 = vmul.f32 %v986, %v1004
    %v1008 = vmul.f32 %v988, %v1004
    %v1009 = vmul.f32 %v990, %v1004
    %v1010 = vmul.f32 %v992, %v1004
    %v1011 = vmul.f32 %v994, %v1004
    %v1012 = vmul.f32 %v996, %v1004
    %v1014 = vrot.slane %v858, 1
    %v1015 = vrot.slane %v858, 2
    %v1016 = vrot.slane %v858, 3
    %v1017 = vrot.slane %v858, 4
    %v1018 = vrot.slane %v858, 5
    %v1019 = vrot.slane %v858, 6
    %v1020 = vrot.slane %v858, 7
    %v1021 = vperm.slane %v858, 0
    %v1022 = vperm.slane %v1014, 0
    %v1023 = vperm.slane %v1015, 0
    %v1024 = vperm.slane %v1016, 0
    %v1025 = vperm.slane %v1017, 0
    %v1026 = vperm.slane %v1018, 0
    %v1027 = vperm.slane %v1019, 0
    %v1028 = vperm.slane %v1020, 0
    %v1037 = vmul.f32 %v1005, %v1021
    %v1038 = vmul.f32 %v1006, %v1022
    %v1039 = vmul.f32 %v1007, %v1023
    %v1040 = vmul.f32 %v1008, %v1024
    %v1041 = vmul.f32 %v1009, %v1025
    %v1042 = vmul.f32 %v1010, %v1026
    %v1043 = vmul.f32 %v1011, %v1027
    %v1044 = vmul.f32 %v1012, %v1028
    %v1045 = vadd.f32 %v1037, %v1038
    %v1046 = vadd.f32 %v1045, %v1039
    %v1047 = vadd.f32 %v1046, %v1040
    %v1048 = vadd.f32 %v1047, %v1041
    %v1049 = vadd.f32 %v1048, %v1042
    %v1050 = vadd.f32 %v1049, %v1043
    %v1051 = vadd.f32 %v1050, %v1044
    %v1053 = vrot.slane %v884, 1
    %v1054 = vrot.slane %v884, 2
    %v1055 = vrot.slane %v884, 3
    %v1056 = vrot.slane %v884, 4
    %v1057 = vrot.slane %v884, 5
    %v1058 = vrot.slane %v884, 6
    %v1059 = vrot.slane %v884, 7
    %v1060 = vperm.slane %v884, 0
    %v1061 = vperm.slane %v1053, 0
    %v1062 = vperm.slane %v1054, 0
    %v1063 = vperm.slane %v1055, 0
    %v1064 = vperm.slane %v1056, 0
    %v1065 = vperm.slane %v1057, 0
    %v1066 = vperm.slane %v1058, 0
    %v1067 = vperm.slane %v1059, 0
    %v1076 = vmul.f32 %v1005, %v1060
    %v1077 = vmul.f32 %v1006, %v1061
    %v1078 = vmul.f32 %v1007, %v1062
    %v1079 = vmul.f32 %v1008, %v1063
    %v1080 = vmul.f32 %v1009, %v1064
    %v1081 = vmul.f32 %v1010, %v1065
    %v1082 = vmul.f32 %v1011, %v1066
    %v1083 = vmul.f32 %v1012, %v1067
    %v1084 = vadd.f32 %v1076, %v1077
    %v1085 = vadd.f32 %v1084, %v1078
    %v1086 = vadd.f32 %v1085, %v1079
    %v1087 = vadd.f32 %v1086, %v1080
    %v1088 = vadd.f32 %v1087, %v1081
    %v1089 = vadd.f32 %v1088, %v1082
    %v1090 = vadd.f32 %v1089, %v1083
    %v1091 = vld [vmem:[#allocation2 + $0x460] sm:$0xff]
    %v1092 = vld [vmem:[#allocation2 + $0x468] sm:$0xff]
    %v1093 = vld [vmem:[#allocation2 + $0x470] sm:$0xff]
    %v1094 = vld [vmem:[#allocation2 + $0x478] sm:$0xff]
    %v1095 = vld [vmem:[#allocation2 + $0x480] sm:$0xff]
    %v1096 = vld [vmem:[#allocation2 + $0x488] sm:$0xff]
    %v1097 = vld [vmem:[#allocation2 + $0x490] sm:$0xff]
    %v1098 = vld [vmem:[#allocation2 + $0x498] sm:$0xff]
    %v1099 = vld [vmem:[#allocation2 + $0x4a0] sm:$0xff]
    %v1100 = vld [vmem:[#allocation2 + $0x4a8] sm:$0xff]
    %v1101 = vld [vmem:[#allocation2 + $0x4b0] sm:$0xff]
    %v1102 = vld [vmem:[#allocation2 + $0x4b8] sm:$0xff]
    %v1103 = vld [vmem:[#allocation2 + $0x4c0] sm:$0xff]
    %v1104 = vld [vmem:[#allocation2 + $0x4c8] sm:$0xff]
    %v1105 = vld [vmem:[#allocation2 + $0x4d0] sm:$0xff]
    %v1106 = vld [vmem:[#allocation2 + $0x4d8] sm:$0xff]
    %v1107 = vld [vmem:[#allocation2 + $0x4e0] sm:$0xff]
    %v1108 = vld [vmem:[#allocation2 + $0x4e8] sm:$0xff]
    %v1109 = vld [vmem:[#allocation2 + $0x4f0] sm:$0xff]
    %v1110 = vld [vmem:[#allocation2 + $0x4f8] sm:$0xff]
    %v1111 = vld [vmem:[#allocation2 + $0x500] sm:$0xff]
    %v1112 = vld [vmem:[#allocation2 + $0x508] sm:$0xff]
    %v1113 = vld [vmem:[#allocation2 + $0x510] sm:$0xff]
    %v1114 = vld [vmem:[#allocation2 + $0x518] sm:$0xff]
    %v1115 = vld [vmem:[#allocation2 + $0x520] sm:$0xff]
    %v1116 = vld [vmem:[#allocation2 + $0x528] sm:$0xff]
    %v1117 = vld [vmem:[#allocation2 + $0x530] sm:$0xff]
    %v1118 = vld [vmem:[#allocation2 + $0x538] sm:$0xff]
    %v1119 = vld [vmem:[#allocation2 + $0x540] sm:$0xff]
    %v1120 = vld [vmem:[#allocation2 + $0x548] sm:$0xff]
    %v1121 = vld [vmem:[#allocation2 + $0x550] sm:$0xff]
    %v1122 = vld [vmem:[#allocation2 + $0x558] sm:$0xff]
    %v1123 = vld [vmem:[#allocation2 + $0x560] sm:$0xff]
    %1124 = vmatpush.msra.mxu0 %v1106
    %1125 = vmatpush.msra.mxu0 %v1105
    %1126 = vmatpush.msra.mxu0 %v1104
    %1127 = vmatpush.msra.mxu0 %v1103
    %1128 = vmatpush.msra.mxu0 %v1102
    %1129 = vmatpush.msra.mxu0 %v1101
    %1130 = vmatpush.msra.mxu0 %v1100
    %1131 = vmatpush.msra.mxu0 %v1099
    %1132 = vmatpush.msra.mxu0 %v1098
    %1133 = vmatpush.msra.mxu0 %v1097
    %1134 = vmatpush.msra.mxu0 %v1096
    %1135 = vmatpush.msra.mxu0 %v1095
    %1136 = vmatpush.msra.mxu0 %v1094
    %1137 = vmatpush.msra.mxu0 %v1093
    %1138 = vmatpush.msra.mxu0 %v1092
    %1139 = vmatpush.msra.mxu0 %v1091
    %1140 = vmatmul.f32.gmra.mxu0 %v1051
    %v1141 = vpop.f32.mrf.mxu0
    %v1142 = vadd.f32 %v1123, %v1141
    %1143 = vdwg.mxu0
    %1144 = vmatpush.msra.mxu0 %v1122
    %1145 = vmatpush.msra.mxu0 %v1121
    %1146 = vmatpush.msra.mxu0 %v1120
    %1147 = vmatpush.msra.mxu0 %v1119
    %1148 = vmatpush.msra.mxu0 %v1118
    %1149 = vmatpush.msra.mxu0 %v1117
    %1150 = vmatpush.msra.mxu0 %v1116
    %1151 = vmatpush.msra.mxu0 %v1115
    %1152 = vmatpush.msra.mxu0 %v1114
    %1153 = vmatpush.msra.mxu0 %v1113
    %1154 = vmatpush.msra.mxu0 %v1112
    %1155 = vmatpush.msra.mxu0 %v1111
    %1156 = vmatpush.msra.mxu0 %v1110
    %1157 = vmatpush.msra.mxu0 %v1109
    %1158 = vmatpush.msra.mxu0 %v1108
    %1159 = vmatpush.msra.mxu0 %v1107
    %1160 = vmatmul.f32.gmra.mxu0 %v1090
    %v1161 = vpop.f32.mrf.mxu0
    %v1162 = vadd.f32 %v1142, %v1161
    %1163 = vdwg.mxu0
    %v1164 = vadd.f32 %v726, %v1162
    %v1165 = vld [vmem:[#allocation2 + $0x568] sm:$0xff]
    %v1166 = vld [vmem:[#allocation2 + $0x570] sm:$0xff]
    %v1168 = vsel %vm100, %v1164, 0
    %1170 = vmatpush.msra.mxu0 0.0
    %1171 = vmatpush.msra.mxu0 0.0
    %1172 = vmatpush.msra.mxu0 0.0
    %1173 = vmatpush.msra.mxu0 0.0
    %1174 = vmatpush.msra.mxu0 0.0
    %1175 = vmatpush.msra.mxu0 0.0
    %1176 = vmatpush.msra.mxu0 0.0
    %1177 = vmatpush.msra.mxu0 0.0
    %1178 = vmatpush.msra.mxu0 0.0
    %1179 = vmatpush.msra.mxu0 0.0
    %1180 = vmatpush.msra.mxu0 0.0
    %1181 = vmatpush.msra.mxu0 %v34
    %1182 = vmatpush.msra.mxu0 %v33
    %1183 = vmatpush.msra.mxu0 %v32
    %1184 = vmatpush.msra.mxu0 %v31
    %1185 = vmatpush.msra.mxu0 %v30
    %1186 = vmatmul.f32.gmra.mxu0 %v1168
    %v1187 = vpop.f32.mrf.mxu0
    %v1188 = vadd.f32 0.0, %v1187
    %1189 = vdwg.mxu0
    %v1190 = vsub.f32 %v1164, %v1188
    %v1191 = vmul.f32 %v1190, %v1190
    %v1193 = vsel %vm100, %v1191, 0
    %1195 = vmatpush.msra.mxu0 0.0
    %1196 = vmatpush.msra.mxu0 0.0
    %1197 = vmatpush.msra.mxu0 0.0
    %1198 = vmatpush.msra.mxu0 0.0
    %1199 = vmatpush.msra.mxu0 0.0
    %1200 = vmatpush.msra.mxu0 0.0
    %1201 = vmatpush.msra.mxu0 0.0
    %1202 = vmatpush.msra.mxu0 0.0
    %1203 = vmatpush.msra.mxu0 0.0
    %1204 = vmatpush.msra.mxu0 0.0
    %1205 = vmatpush.msra.mxu0 0.0
    %1206 = vmatpush.msra.mxu0 %v34
    %1207 = vmatpush.msra.mxu0 %v33
    %1208 = vmatpush.msra.mxu0 %v32
    %1209 = vmatpush.msra.mxu0 %v31
    %1210 = vmatpush.msra.mxu0 %v30
    %1211 = vmatmul.f32.gmra.mxu0 %v1193
    %v1212 = vpop.f32.mrf.mxu0
    %v1213 = vadd.f32 1e-05, %v1212
    %1214 = vdwg.mxu0
    %v1215 = vrsqrt.pop %v1213
    %v1216 = vmul.f32 %v1215, %v1213
    %v1217 = vmul.f32 %v1216, %v1215
    %v1218 = vmul.f32 0.5, %v1217
    %v1219 = vsub.f32 1.5, %v1218
    %v1220 = vmul.f32 %v1215, %v1219
    %vm1221 = vweird.f32 %v1213
    %vm1222 = vweird.f32 %v1215
    %vm1223 = vmor %vm1221, %vm1222
    %v1224 = vsel %vm1223, %v1215, %v1220
    %v1225 = vmul.f32 %v1190, %v1224
    %v1226 = vmul.f32 %v1225, %v1165
    %v1227 = vadd.f32 %v1226, %v1166
    %v1228 = vld [vmem:[#allocation2 + $0x578] sm:$0xff]
    %v1229 = vld [vmem:[#allocation2 + $0x580] sm:$0xff]
    %v1230 = vld [vmem:[#allocation2 + $0x588] sm:$0xff]
    %v1231 = vld [vmem:[#allocation2 + $0x590] sm:$0xff]
    %v1232 = vld [vmem:[#allocation2 + $0x598] sm:$0xff]
    %v1233 = vld [vmem:[#allocation2 + $0x5a0] sm:$0xff]
    %v1235 = vsel %vm100, %v1227, 0
    %1237 = vmatpush.msra.mxu0 0.0
    %1238 = vmatpush.msra.mxu0 0.0
    %1239 = vmatpush.msra.mxu0 0.0
    %1240 = vmatpush.msra.mxu0 0.0
    %1241 = vmatpush.msra.mxu0 0.0
    %1242 = vmatpush.msra.mxu0 0.0
    %1243 = vmatpush.msra.mxu0 0.0
    %1244 = vmatpush.msra.mxu0 0.0
    %1245 = vmatpush.msra.mxu0 0.0
    %1246 = vmatpush.msra.mxu0 0.0
    %1247 = vmatpush.msra.mxu0 0.0
    %1248 = vmatpush.msra.mxu0 %v1232
    %1249 = vmatpush.msra.mxu0 %v1231
    %1250 = vmatpush.msra.mxu0 %v1230
    %1251 = vmatpush.msra.mxu0 %v1229
    %1252 = vmatpush.msra.mxu0 %v1228
    %1253 = vmatmul.f32.gmra.mxu0 %v1235
    %v1254 = vpop.f32.mrf.mxu0
    %v1255 = vadd.f32 %v1233, %v1254
    %1256 = vdwg.mxu0
    %v1257 = vmax.f32 %v1255, 0.0
    %v1258 = vld [vmem:[#allocation2 + $0x5a8] sm:$0xff]
    %v1259 = vld [vmem:[#allocation2 + $0x5b0] sm:$0xff]
    %v1260 = vld [vmem:[#allocation2 + $0x5b8] sm:$0xff]
    %v1261 = vld [vmem:[#allocation2 + $0x5c0] sm:$0xff]
    %v1262 = vld [vmem:[#allocation2 + $0x5c8] sm:$0xff]
    %v1263 = vld [vmem:[#allocation2 + $0x5d0] sm:$0xff]
    %v1264 = vld [vmem:[#allocation2 + $0x5d8] sm:$0xff]
    %v1265 = vld [vmem:[#allocation2 + $0x5e0] sm:$0xff]
    %v1266 = vld [vmem:[#allocation2 + $0x5e8] sm:$0xff]
    %v1267 = vld [vmem:[#allocation2 + $0x5f0] sm:$0xff]
    %v1268 = vld [vmem:[#allocation2 + $0x5f8] sm:$0xff]
    %v1269 = vld [vmem:[#allocation2 + $0x600] sm:$0xff]
    %v1270 = vld [vmem:[#allocation2 + $0x608] sm:$0xff]
    %v1271 = vld [vmem:[#allocation2 + $0x610] sm:$0xff]
    %v1272 = vld [vmem:[#allocation2 + $0x618] sm:$0xff]
    %v1273 = vld [vmem:[#allocation2 + $0x620] sm:$0xff]
    %v1274 = vld [vmem:[#allocation2 + $0x628] sm:$0xff]
    %1275 = vmatpush.msra.mxu0 %v1273
    %1276 = vmatpush.msra.mxu0 %v1272
    %1277 = vmatpush.msra.mxu0 %v1271
    %1278 = vmatpush.msra.mxu0 %v1270
    %1279 = vmatpush.msra.mxu0 %v1269
    %1280 = vmatpush.msra.mxu0 %v1268
    %1281 = vmatpush.msra.mxu0 %v1267
    %1282 = vmatpush.msra.mxu0 %v1266
    %1283 = vmatpush.msra.mxu0 %v1265
    %1284 = vmatpush.msra.mxu0 %v1264
    %1285 = vmatpush.msra.mxu0 %v1263
    %1286 = vmatpush.msra.mxu0 %v1262
    %1287 = vmatpush.msra.mxu0 %v1261
    %1288 = vmatpush.msra.mxu0 %v1260
    %1289 = vmatpush.msra.mxu0 %v1259
    %1290 = vmatpush.msra.mxu0 %v1258
    %1291 = vmatmul.f32.gmra.mxu0 %v1257
    %v1292 = vpop.f32.mrf.mxu0
    %v1293 = vadd.f32 %v1274, %v1292
    %1294 = vdwg.mxu0
    %v1295 = vadd.f32 %v1227, %v1293
    %v1296 = vld [vmem:[#allocation2 + $0x630] sm:$0xff]
    %v1297 = vld [vmem:[#allocation2 + $0x638] sm:$0xff]
    %v1299 = vsel %vm100, %v1295, 0
    %1301 = vmatpush.msra.mxu0 0.0
    %1302 = vmatpush.msra.mxu0 0.0
    %1303 = vmatpush.msra.mxu0 0.0
    %1304 = vmatpush.msra.mxu0 0.0
    %1305 = vmatpush.msra.mxu0 0.0
    %1306 = vmatpush.msra.mxu0 0.0
    %1307 = vmatpush.msra.mxu0 0.0
    %1308 = vmatpush.msra.mxu0 0.0
    %1309 = vmatpush.msra.mxu0 0.0
    %1310 = vmatpush.msra.mxu0 0.0
    %1311 = vmatpush.msra.mxu0 0.0
    %1312 = vmatpush.msra.mxu0 %v34
    %1313 = vmatpush.msra.mxu0 %v33
    %1314 = vmatpush.msra.mxu0 %v32
    %1315 = vmatpush.msra.mxu0 %v31
    %1316 = vmatpush.msra.mxu0 %v30
    %1317 = vmatmul.f32.gmra.mxu0 %v1299
    %v1318 = vpop.f32.mrf.mxu0
    %v1319 = vadd.f32 0.0, %v1318
    %1320 = vdwg.mxu0
    %v1321 = vsub.f32 %v1295, %v1319
    %v1322 = vmul.f32 %v1321, %v1321
    %v1324 = vsel %vm100, %v1322, 0
    %1326 = vmatpush.msra.mxu0 0.0
    %1327 = vmatpush.msra.mxu0 0.0
    %1328 = vmatpush.msra.mxu0 0.0
    %1329 = vmatpush.msra.mxu0 0.0
    %1330 = vmatpush.msra.mxu0 0.0
    %1331 = vmatpush.msra.mxu0 0.0
    %1332 = vmatpush.msra.mxu0 0.0
    %1333 = vmatpush.msra.mxu0 0.0
    %1334 = vmatpush.msra.mxu0 0.0
    %1335 = vmatpush.msra.mxu0 0.0
    %1336 = vmatpush.msra.mxu0 0.0
    %1337 = vmatpush.msra.mxu0 %v34
    %1338 = vmatpush.msra.mxu0 %v33
    %1339 = vmatpush.msra.mxu0 %v32
    %1340 = vmatpush.msra.mxu0 %v31
    %1341 = vmatpush.msra.mxu0 %v30
    %1342 = vmatmul.f32.gmra.mxu0 %v1324
    %v1343 = vpop.f32.mrf.mxu0
    %v1344 = vadd.f32 1e-05, %v1343
    %1345 = vdwg.mxu0
    %v1346 = vrsqrt.pop %v1344
    %v1347 = vmul.f32 %v1346, %v1344
    %v1348 = vmul.f32 %v1347, %v1346
    %v1349 = vmul.f32 0.5, %v1348
    %v1350 = vsub.f32 1.5, %v1349
    %v1351 = vmul.f32 %v1346, %v1350
    %vm1352 = vweird.f32 %v1344
    %vm1353 = vweird.f32 %v1346
    %vm1354 = vmor %vm1352, %vm1353
    %v1355 = vsel %vm1354, %v1346, %v1351
    %v1356 = vmul.f32 %v1321, %v1355
    %v1357 = vmul.f32 %v1356, %v1296
    %v1358 = vadd.f32 %v1357, %v1297
    %vm1359 = vcmask 64512
    %v1361 = vsel %vm1359, %v29, 0
    %1363 = vmatpush.msra.mxu0 0.0
    %1364 = vmatpush.msra.mxu0 0.0
    %1365 = vmatpush.msra.mxu0 0.0
    %1366 = vmatpush.msra.mxu0 0.0
    %1367 = vmatpush.msra.mxu0 0.0
    %1368 = vmatpush.msra.mxu0 0.0
    %1369 = vmatpush.msra.mxu0 0.0
    %1370 = vmatpush.msra.mxu0 0.0
    %1371 = vmatpush.msra.mxu0 0.0
    %1372 = vmatpush.msra.mxu0 0.0
    %1373 = vmatpush.msra.mxu0 0.0
    %1374 = vmatpush.msra.mxu0 0.0
    %1375 = vmatpush.msra.mxu0 0.0
    %1376 = vmatpush.msra.mxu0 0.0
    %1377 = vmatpush.msra.mxu0 0.0
    %1378 = vmatpush.msra.mxu0 %v1358
    %1379 = vmatmul.f32.gmra.mxu0 %v1361
    %v1380 = vpop.f32.mrf.mxu0
    %v1381 = vadd.f32 0.0, %v1380
    %1382 = vdwg.mxu0
    %v1383 = vld [vmem:[#allocation2 + $0x640] sm:$0xff]
    %v1384 = vld [vmem:[#allocation2 + $0x648] sm:$0xff]
    %v1385 = vld [vmem:[#allocation2 + $0x650] sm:$0xff]
    %v1386 = vld [vmem:[#allocation2 + $0x658] sm:$0xff]
    %v1387 = vld [vmem:[#allocation2 + $0x660] sm:$0xff]
    %v1388 = vld [vmem:[#allocation2 + $0x668] sm:$0x3]
    %v1390 = vsel %vm100, %v1381, 0
    %1392 = vmatpush.msra.mxu0 0.0
    %1393 = vmatpush.msra.mxu0 0.0
    %1394 = vmatpush.msra.mxu0 0.0
    %1395 = vmatpush.msra.mxu0 0.0
    %1396 = vmatpush.msra.mxu0 0.0
    %1397 = vmatpush.msra.mxu0 0.0
    %1398 = vmatpush.msra.mxu0 0.0
    %1399 = vmatpush.msra.mxu0 0.0
    %1400 = vmatpush.msra.mxu0 0.0
    %1401 = vmatpush.msra.mxu0 0.0
    %1402 = vmatpush.msra.mxu0 0.0
    %1403 = vmatpush.msra.mxu0 %v1387
    %1404 = vmatpush.msra.mxu0 %v1386
    %1405 = vmatpush.msra.mxu0 %v1385
    %1406 = vmatpush.msra.mxu0 %v1384
    %1407 = vmatpush.msra.mxu0 %v1383
    %1408 = vmatmul.f32.gmra.mxu0 %v1390
    %v1409 = vpop.f32.mrf.mxu0
    %v1410 = vadd.f32 %v1388, %v1409
    %1411 = vdwg.mxu0
    %v1412 = vld [vmem:[#allocation2 + $0x670] sm:$0xff]
    %v1413 = vld [vmem:[#allocation2 + $0x678] sm:$0xff]
    %v1414 = vld [vmem:[#allocation2 + $0x680] sm:$0xff]
    %v1415 = vld [vmem:[#allocation2 + $0x688] sm:$0xff]
    %v1416 = vld [vmem:[#allocation2 + $0x690] sm:$0xff]
    %v1417 = vld [vmem:[#allocation2 + $0x698] sm:$0xff]
    %v1418 = vld [vmem:[#allocation2 + $0x6a0] sm:$0xff]
    %v1419 = vld [vmem:[#allocation2 + $0x6a8] sm:$0xff]
    %v1420 = vld [vmem:[#allocation2 + $0x6b0] sm:$0x3]
    %vm1421 = vcmask 523264
    %v1423 = vsel %vm1421, %v1410, 0
    %1425 = vmatpush.msra.mxu0 0.0
    %1426 = vmatpush.msra.mxu0 0.0
    %1427 = vmatpush.msra.mxu0 0.0
    %1428 = vmatpush.msra.mxu0 0.0
    %1429 = vmatpush.msra.mxu0 0.0
    %1430 = vmatpush.msra.mxu0 0.0
    %1431 = vmatpush.msra.mxu0 0.0
    %1432 = vmatpush.msra.mxu0 0.0
    %1433 = vmatpush.msra.mxu0 %v1419
    %1434 = vmatpush.msra.mxu0 %v1418
    %1435 = vmatpush.msra.mxu0 %v1417
    %1436 = vmatpush.msra.mxu0 %v1416
    %1437 = vmatpush.msra.mxu0 %v1415
    %1438 = vmatpush.msra.mxu0 %v1414
    %1439 = vmatpush.msra.mxu0 %v1413
    %1440 = vmatpush.msra.mxu0 %v1412
    %1441 = vmatmul.f32.gmra.mxu0 %v1423
    %v1442 = vpop.f32.mrf.mxu0
    %v1443 = vadd.f32 %v1420, %v1442
    %1444 = vdwg.mxu0
    %v1445 = vmax.f32 %v1443, 0.0
    %v1446 = vld [vmem:[#allocation2 + $0x6b8] sm:$0xff]
    %v1447 = vld [vmem:[#allocation2 + $0x6c0] sm:$0xff]
    %v1448 = vld [vmem:[#allocation2 + $0x6c8] sm:$0xff]
    %v1449 = vld [vmem:[#allocation2 + $0x6d0] sm:$0xff]
    %v1450 = vld [vmem:[#allocation2 + $0x6d8] sm:$0xff]
    %v1451 = vld [vmem:[#allocation2 + $0x6e0] sm:$0xff]
    %v1452 = vld [vmem:[#allocation2 + $0x6e8] sm:$0xff]
    %v1453 = vld [vmem:[#allocation2 + $0x6f0] sm:$0xff]
    %v1454 = vld [vmem:[#allocation2 + $0x6f8] sm:$0xff]
    %v1455 = vld [vmem:[#allocation2 + $0x700] sm:$0xff]
    %v1456 = vld [vmem:[#allocation2 + $0x708] sm:$0xff]
    %v1457 = vld [vmem:[#allocation2 + $0x710] sm:$0xff]
    %v1458 = vld [vmem:[#allocation2 + $0x718] sm:$0xff]
    %v1459 = vld [vmem:[#allocation2 + $0x720] sm:$0xff]
    %v1460 = vld [vmem:[#allocation2 + $0x728] sm:$0xff]
    %v1461 = vld [vmem:[#allocation2 + $0x730] sm:$0xff]
    %v1462 = vld [vmem:[#allocation2 + $0x738] sm:$0x3]
    %1463 = vmatpush.msra.mxu0 %v1461
    %1464 = vmatpush.msra.mxu0 %v1460
    %1465 = vmatpush.msra.mxu0 %v1459
    %1466 = vmatpush.msra.mxu0 %v1458
    %1467 = vmatpush.msra.mxu0 %v1457
    %1468 = vmatpush.msra.mxu0 %v1456
    %1469 = vmatpush.msra.mxu0 %v1455
    %1470 = vmatpush.msra.mxu0 %v1454
    %1471 = vmatpush.msra.mxu0 %v1453
    %1472 = vmatpush.msra.mxu0 %v1452
    %1473 = vmatpush.msra.mxu0 %v1451
    %1474 = vmatpush.msra.mxu0 %v1450
    %1475 = vmatpush.msra.mxu0 %v1449
    %1476 = vmatpush.msra.mxu0 %v1448
    %1477 = vmatpush.msra.mxu0 %v1447
    %1478 = vmatpush.msra.mxu0 %v1446
    %1479 = vmatmul.f32.gmra.mxu0 %v1445
    %v1480 = vpop.f32.mrf.mxu0
    %v1481 = vadd.f32 %v1462, %v1480
    %1482 = vdwg.mxu0
    %v1483 = vmax.f32 %v1481, 0.0
    %v1484 = vld [vmem:[#allocation2 + $0x740] sm:$0xff]
    %v1485 = vld [vmem:[#allocation2 + $0x748] sm:$0xff]
    %v1486 = vld [vmem:[#allocation2 + $0x750] sm:$0xff]
    %v1487 = vld [vmem:[#allocation2 + $0x758] sm:$0xff]
    %v1488 = vld [vmem:[#allocation2 + $0x760] sm:$0x3]
    %vm1489 = vcmask 261120
    %v1491 = vsel %vm1489, %v1483, 0
    %1493 = vmatpush.msra.mxu0 0.0
    %1494 = vmatpush.msra.mxu0 0.0
    %1495 = vmatpush.msra.mxu0 0.0
    %1496 = vmatpush.msra.mxu0 0.0
    %1497 = vmatpush.msra.mxu0 0.0
    %1498 = vmatpush.msra.mxu0 0.0
    %1499 = vmatpush.msra.mxu0 0.0
    %1500 = vmatpush.msra.mxu0 0.0
    %1501 = vmatpush.msra.mxu0 0.0
    %1502 = vmatpush.msra.mxu0 0.0
    %1503 = vmatpush.msra.mxu0 0.0
    %1504 = vmatpush.msra.mxu0 0.0
    %1505 = vmatpush.msra.mxu0 %v1487
    %1506 = vmatpush.msra.mxu0 %v1486
    %1507 = vmatpush.msra.mxu0 %v1485
    %1508 = vmatpush.msra.mxu0 %v1484
    %1509 = vmatmul.f32.gmra.mxu0 %v1491
    %v1510 = vpop.f32.mrf.mxu0
    %v1511 = vadd.f32 %v1488, %v1510
    %1512 = vdwg.mxu0
    %vm1513 = vcmask 9216
    %1514 = vst.msk [vmem:[#allocation5] sm:$0x3] %vm1513, %v1511
    // Predicated region
    $region14: #{transformer_forward.1} parent=1 // pred_check
      _
    $region15: #{transformer_forward.1} parent=1 // pred_check_branch
      %1516 = sbr.rel (0) target = $region17
    $region16: #{transformer_forward.1} parent=1 // pred_region
      %1518 = vsyncadd [#allocation4], 0
      %s1520 = sshll.u32 [#allocation5], 4
      %s1521 = int_to_ptr.vmem [resolvable:$true] %s1520
      %s1522 = sshll.u32 %s2, 4
      %s1523 = int_to_ptr.hbm [resolvable:$true] %s1522
      %1525 = dma.vmem_to_hbm [thread:$0]  %s1521, 32, %s1523, [#allocation4]
    $region17: #{transformer_forward.1} parent=1 // pred_fallthru
      _
    // Predicated region
    $region18: #{transformer_forward.1} parent=1 // pred_check
      _
    $region19: #{transformer_forward.1} parent=1 // pred_check_branch
      %1527 = sbr.rel (0) target = $region21
    $region20: #{transformer_forward.1} parent=1 // pred_region
      %1529 = dma.done [#allocation4], 32
    $region21: #{transformer_forward.1} parent=1 // pred_fallthru
      _
    %1530 = vsyncpa [#allocation3], 1
    %1531 = vsyncpa [#allocation4], 1

</llo_original>
